<compile_context>
chip_gen: v5e
topology: v5e:2x2
jax: 0.10.0
libtpu: 0.0.40
codegen_flags: <defaults>
</compile_context>

<pallas_src>
import functools
import math

import jax
import jax.numpy as jnp
from jax.experimental import pallas as pl
from jax.experimental.pallas import tpu as pltpu

_BIG = 1e9  # sigmoid(_BIG) == 1.0 exactly in f32 -> padded steps are identity.


def _gru_recurrent_kernel(*refs, block_t, hidden, fuse_gates, last_only):
    """Serial GRU recurrence over one (block_t x block_b) tile.

    refs (fuse_gates=True):
      gr, gz, gn : (TB, BB, H) precomputed input projections (+ folded biases)
      whh        : (H, 3H)     fused recurrent weights [W_hr^T | W_hz^T | W_hn^T]
      bhn        : (1, H)      recurrent bias of the n gate (cannot be folded)
      h_out      : (TB, BB, H) per-step hidden states   (full path)
                   (BB, H)     final hidden state        (last_only path)
      h          : (BB, H)     f32 carry scratch, persists across time grid steps
    refs (fuse_gates=False): same but with three separate (H, H) weight refs.
    """
    if fuse_gates:
        gr_ref, gz_ref, gn_ref, whh_ref, bhn_ref, h_out_ref, h_ref = refs
    else:
        (gr_ref, gz_ref, gn_ref, whr_ref, whz_ref, whn_ref, bhn_ref,
         h_out_ref, h_ref) = refs

    H = hidden
    t_idx = pl.program_id(1)

    @pl.when(t_idx == 0)
    def _():
        h_ref[...] = jnp.zeros_like(h_ref)

    # Hoist weight loads and the bias broadcast out of the unrolled loop
    # (JAX does not CSE broadcast_in_dim).
    bhn = jnp.broadcast_to(bhn_ref[...], h_ref.shape).astype(jnp.float32)

    if fuse_gates:
        whh = whh_ref[...]
        w_dtype = whh.dtype

        def gates_matmul(hm):
            # One wide MXU push; slices land on 128-lane boundaries (H%128==0).
            gh = jnp.dot(hm, whh, preferred_element_type=jnp.float32)
            return gh[:, :H], gh[:, H:2 * H], gh[:, 2 * H:3 * H]
    else:
        whr = whr_ref[...]
        whz = whz_ref[...]
        whn = whn_ref[...]
        w_dtype = whr.dtype

        def gates_matmul(hm):
            return (jnp.dot(hm, whr, preferred_element_type=jnp.float32),
                    jnp.dot(hm, whz, preferred_element_type=jnp.float32),
                    jnp.dot(hm, whn, preferred_element_type=jnp.float32))

    def step(i, h):
        # h carry stays f32; only the MXU operand is cast to the weight dtype
        # (no-op for f32, bf16 path if compute_dtype=bf16 is chosen).
        hm = h.astype(w_dtype)
        gh_r, gh_z, gh_n = gates_matmul(hm)
        r = jax.nn.sigmoid(gr_ref[i] + gh_r)
        z = jax.nn.sigmoid(gz_ref[i] + gh_z)
        n = jnp.tanh(gn_ref[i] + r * (gh_n + bhn))
        h_new = (1.0 - z) * n + z * h
        if not last_only:
            h_out_ref[i] = h_new.astype(h_out_ref.dtype)
        return h_new

    h_final = jax.lax.fori_loop(0, block_t, step, h_ref[...], unroll=True)
    h_ref[...] = h_final
    if last_only:
        # Output block is revisited across the time axis; only the final
        # content (== h_{T-1} thanks to identity padding) reaches HBM.
        h_out_ref[...] = h_final.astype(h_out_ref.dtype)


def my_gru_forward(x, params, last_only=False, *,
                   block_t=8, block_b=None, compute_dtype=jnp.float32):
    """x: (B, T, F) float32. Returns (B, T, O) (or (B, 1, O) if last_only)."""
    B, T, F = x.shape
    H = params["w_hh"].shape[1]
    O = params["w_lin"].shape[0]
    f32 = jnp.float32

    w_ih = params["w_ih"].astype(f32)     # (3H, F)
    w_hh = params["w_hh"].astype(f32)     # (3H, H)
    b_ih = params["b_ih"].astype(f32)     # (3H,)
    b_hh = params["b_hh"].astype(f32)     # (3H,)
    w_lin = params["w_lin"].astype(f32)   # (O, H)
    b_lin = params["b_lin"].astype(f32)   # (O,)

    # PyTorch GRU gate order: r | z | n.
    w_ir, w_iz, w_in = w_ih[:H], w_ih[H:2 * H], w_ih[2 * H:]
    w_hr, w_hz, w_hn = w_hh[:H], w_hh[H:2 * H], w_hh[2 * H:]
    b_ir, b_iz, b_in = b_ih[:H], b_ih[H:2 * H], b_ih[2 * H:]
    b_hr, b_hz, b_hn = b_hh[:H], b_hh[H:2 * H], b_hh[2 * H:]

    # ---- Hoisted input projection: one big (B*T, F) x (F, H) GEMM per gate,
    # plain XLA, emitted directly in time-major (T, B, H) layout. Additive
    # recurrent biases (b_hr, b_hz) are folded in here; b_hn stays in-kernel.
    xt = x.astype(compute_dtype)

    def proj(w, bias):
        g = jnp.einsum("btf,hf->tbh", xt, w.astype(compute_dtype),
                       preferred_element_type=f32)
        return g + bias

    gi_r = proj(w_ir, b_ir + b_hr)
    gi_z = proj(w_iz, b_iz + b_hz)
    gi_n = proj(w_in, b_in)

    # ---- Block the time axis to amortize per-grid-step overhead.  Padded
    # steps are made an exact identity on h (z-gate input padded with +BIG so
    # sigmoid -> 1, h_new = h), which keeps the last_only fast path exact.
    block_t = max(1, min(block_t, T))
    T_pad = pl.cdiv(T, block_t) * block_t
    if T_pad != T:
        pad = ((0, T_pad - T), (0, 0), (0, 0))
        gi_r = jnp.pad(gi_r, pad)
        gi_z = jnp.pad(gi_z, pad, constant_values=_BIG)
        gi_n = jnp.pad(gi_n, pad)

    # ---- Optional batch split (v7x megacore: batch axis marked "parallel").
    if block_b is None:
        block_b = B
    assert B % block_b == 0 and (block_b == B or block_b % 8 == 0), \
        "block_b must divide B and be a multiple of 8 (or equal B)"
    nb = B // block_b
    nt = T_pad // block_t

    whr_t = jnp.transpose(w_hr).astype(compute_dtype)   # (H, H)
    whz_t = jnp.transpose(w_hz).astype(compute_dtype)
    whn_t = jnp.transpose(w_hn).astype(compute_dtype)
    bhn2 = b_hn.reshape(1, H)

    # Gate-fused recurrent weight only when the gate boundaries are 128-lane
    # aligned (production H=128); otherwise keep per-gate (H, H) operands so no
    # lane shuffles appear inside the hot unrolled loop.
    fuse_gates = (H % 128 == 0)
    if fuse_gates:
        w_inputs = (jnp.concatenate([whr_t, whz_t, whn_t], axis=1),)   # (H, 3H)
        w_specs = [pl.BlockSpec((H, 3 * H), lambda b, t: (0, 0))]
    else:
        w_inputs = (whr_t, whz_t, whn_t)
        w_specs = [pl.BlockSpec((H, H), lambda b, t: (0, 0))] * 3

    kernel = functools.partial(_gru_recurrent_kernel, block_t=block_t,
                               hidden=H, fuse_gates=fuse_gates,
                               last_only=last_only)

    gi_spec = pl.BlockSpec((block_t, block_b, H), lambda b, t: (t, b, 0))
    b_spec = pl.BlockSpec((1, H), lambda b, t: (0, 0))

    if last_only:
        # Only the final hidden state ever leaves VMEM: the output block index
        # is constant along the time axis (revisited / accumulator pattern).
        out_shape = jax.ShapeDtypeStruct((B, H), f32)
        out_spec = pl.BlockSpec((block_b, H), lambda b, t: (b, 0))
    else:
        out_shape = jax.ShapeDtypeStruct((T_pad, B, H), f32)
        out_spec = pl.BlockSpec((block_t, block_b, H), lambda b, t: (t, b, 0))

    # Only the recurrent weights (3*H*H) + one (1, H) bias + the gi / output
    # tiles are resident, so VMEM stays far below even v7x's 64 MiB at
    # production sizes (W_ih and W_lin never enter the serial loop).
    hs = pl.pallas_call(
        kernel,
        out_shape=out_shape,
        grid_spec=pltpu.PrefetchScalarGridSpec(
            num_scalar_prefetch=0,
            grid=(nb, nt),
            in_specs=[gi_spec, gi_spec, gi_spec, *w_specs, b_spec],
            out_specs=out_spec,
            scratch_shapes=[pltpu.VMEM((block_b, H), f32)],
        ),
        compiler_params=pltpu.CompilerParams(
            # time carries the recurrence -> "arbitrary"; batch is independent
            # -> "parallel" (2x on v7x's two TensorCores when block_b < B).
            dimension_semantics=("parallel", "arbitrary"),
        ),
    )(gi_r, gi_z, gi_n, *w_inputs, bhn2)

    # ---- Output head Linear(H, O) + Tanh, hoisted out of the serial kernel:
    # one batched GEMM instead of a masked 1-lane-wide store per timestep.
    if last_only:
        out = jnp.tanh(hs @ w_lin.T + b_lin)[:, None, :]                 # (B, 1, O)
    else:
        hs = hs[:T]                                                      # drop time padding
        out = jnp.tanh(jnp.einsum("tbh,oh->bto", hs, w_lin) + b_lin)     # (B, T, O)
    return out


def _reference_forward(x, params, last_only=False):
    """Pure-JAX reference (mirrors torch.nn.GRU + Linear + Tanh) for validation."""
    w_ih, w_hh = params["w_ih"], params["w_hh"]
    b_ih, b_hh = params["b_ih"], params["b_hh"]
    w_lin, b_lin = params["w_lin"], params["b_lin"]
    H = w_hh.shape[1]
    B, T, F = x.shape

    def step(h, x_t):
        gi = x_t @ w_ih.T + b_ih
        gh = h @ w_hh.T + b_hh
        i_r, i_z, i_n = gi[:, :H], gi[:, H:2 * H], gi[:, 2 * H:]
        h_r, h_z, h_n = gh[:, :H], gh[:, H:2 * H], gh[:, 2 * H:]
        r = jax.nn.sigmoid(i_r + h_r)
        z = jax.nn.sigmoid(i_z + h_z)
        n = jnp.tanh(i_n + r * h_n)
        h_new = (1.0 - z) * n + z * h
        return h_new, h_new

    h0 = jnp.zeros((B, H), jnp.float32)
    _, hs = jax.lax.scan(step, h0, jnp.transpose(x, (1, 0, 2)))
    hs = jnp.transpose(hs, (1, 0, 2))                       # (B, T, H)
    out = jnp.tanh(hs @ w_lin.T + b_lin)
    if last_only:
        out = out[:, -1:, :]
    return out


def init_params(key, feat_size, hidden_size, output_size):
    """Deterministic init matching PyTorch shapes (uniform(-1/sqrt(H), 1/sqrt(H)))."""
    ks = jax.random.split(key, 6)
    bound = 1.0 / math.sqrt(hidden_size)
    u = lambda k, shp: jax.random.uniform(k, shp, jnp.float32, -bound, bound)
    return {
        "w_ih": u(ks[0], (3 * hidden_size, feat_size)),
        "w_hh": u(ks[1], (3 * hidden_size, hidden_size)),
        "b_ih": u(ks[2], (3 * hidden_size,)),
        "b_hh": u(ks[3], (3 * hidden_size,)),
        "w_lin": u(ks[4], (output_size, hidden_size)),
        "b_lin": u(ks[5], (output_size,)),
    }


if __name__ == "__main__":
    key = jax.random.PRNGKey(0)

    configs = [
        # (B, T, F, H, O, block_t)
        (2, 12, 16, 32, 1, 8),    # per-gate path (H % 128 != 0), time padding
        (8, 10, 16, 128, 1, 4),   # fused-gate path (H % 128 == 0), time padding
    ]
    for (B, T, F, H, O, bt) in configs:
        key, k_x, k_p = jax.random.split(key, 3)
        x = jax.random.normal(k_x, (B, T, F), jnp.float32)
        params = init_params(k_p, F, H, O)

        out = jax.block_until_ready(
            my_gru_forward(x, params, last_only=False, block_t=bt))
        ref = _reference_forward(x, params, last_only=False)
        assert out.shape == (B, T, O), out.shape
        assert jnp.allclose(out, ref, atol=1e-4, rtol=1e-4), (
            float(jnp.max(jnp.abs(out - ref))))

        out_last = jax.block_until_ready(
            my_gru_forward(x, params, last_only=True, block_t=bt))
        ref_last = _reference_forward(x, params, last_only=True)
        assert out_last.shape == (B, 1, O), out_last.shape
        assert jnp.allclose(out_last, ref_last, atol=1e-4, rtol=1e-4), (
            float(jnp.max(jnp.abs(out_last - ref_last))))

    print("KERNEL_OK")
</pallas_src>

<mosaic_0001>
module attributes {stable_mosaic.version = 11 : i64} {
  func.func @_gru_recurrent_kernel(%arg0: i32, %arg1: i32, %arg2: memref<8x2x32xf32, #tpu.memory_space<vmem>>, %arg3: memref<8x2x32xf32, #tpu.memory_space<vmem>>, %arg4: memref<8x2x32xf32, #tpu.memory_space<vmem>>, %arg5: memref<32x32xf32, #tpu.memory_space<vmem>>, %arg6: memref<32x32xf32, #tpu.memory_space<vmem>>, %arg7: memref<32x32xf32, #tpu.memory_space<vmem>>, %arg8: memref<1x32xf32, #tpu.memory_space<vmem>>, %arg9: memref<8x2x32xf32, #tpu.memory_space<vmem>>, %arg10: memref<2x32xf32, #tpu.memory_space<vmem>>) attributes {dimension_semantics = [#tpu.dimension_semantics<parallel>, #tpu.dimension_semantics<arbitrary>], iteration_bounds = array<i64: 1, 2>, scalar_prefetch = 0 : i64, scratch_operands = 1 : i64, tpu.core_type = #tpu.core_type<tc>, window_params = [{transform_indices = @transform_0, window_bounds = array<i64: 8, 2, 32>}, {transform_indices = @transform_1, window_bounds = array<i64: 8, 2, 32>}, {transform_indices = @transform_2, window_bounds = array<i64: 8, 2, 32>}, {pipeline_mode = #tpu.pipeline_mode<synchronous>, transform_indices = @transform_3, window_bounds = array<i64: 32, 32>}, {pipeline_mode = #tpu.pipeline_mode<synchronous>, transform_indices = @transform_4, window_bounds = array<i64: 32, 32>}, {pipeline_mode = #tpu.pipeline_mode<synchronous>, transform_indices = @transform_5, window_bounds = array<i64: 32, 32>}, {pipeline_mode = #tpu.pipeline_mode<synchronous>, transform_indices = @transform_6, window_bounds = array<i64: 1, 32>}, {transform_indices = @transform_7, window_bounds = array<i64: 8, 2, 32>}]} {
    %c0_i32 = arith.constant 0 : i32
    %0 = arith.cmpi eq, %arg1, %c0_i32 : i32
    %1 = arith.extui %0 : i1 to i32
    %c0_i32_0 = arith.constant 0 : i32
    %2 = arith.cmpi ne, %1, %c0_i32_0 : i32
    scf.if %2 {
      %cst_124 = arith.constant 0.000000e+00 : f32
      %307 = vector.broadcast %cst_124 : f32 to vector<2x32xf32>
      %c0_125 = arith.constant 0 : index
      %c0_126 = arith.constant 0 : index
      %308 = vector.load %arg10[%c0_125, %c0_126] : memref<2x32xf32, #tpu.memory_space<vmem>>, vector<2x32xf32>
      tpu.vector_store %arg10[%c0_125, %c0_126], %307 {strides = array<i32>} : memref<2x32xf32, #tpu.memory_space<vmem>>, vector<2x32xf32>,
    } else {
    }
    %c0 = arith.constant 0 : index
    %c0_1 = arith.constant 0 : index
    %3 = vector.load %arg8[%c0, %c0_1] : memref<1x32xf32, #tpu.memory_space<vmem>>, vector<1x32xf32>
    %4 = vector.shape_cast %3 : vector<1x32xf32> to vector<1x32xf32>
    %5 = vector.broadcast %4 : vector<1x32xf32> to vector<2x32xf32>
    %c0_2 = arith.constant 0 : index
    %c0_3 = arith.constant 0 : index
    %6 = vector.load %arg5[%c0_2, %c0_3] : memref<32x32xf32, #tpu.memory_space<vmem>>, vector<32x32xf32>
    %c0_4 = arith.constant 0 : index
    %c0_5 = arith.constant 0 : index
    %7 = vector.load %arg6[%c0_4, %c0_5] : memref<32x32xf32, #tpu.memory_space<vmem>>, vector<32x32xf32>
    %c0_6 = arith.constant 0 : index
    %c0_7 = arith.constant 0 : index
    %8 = vector.load %arg7[%c0_6, %c0_7] : memref<32x32xf32, #tpu.memory_space<vmem>>, vector<32x32xf32>
    %c0_8 = arith.constant 0 : index
    %c0_9 = arith.constant 0 : index
    %9 = vector.load %arg10[%c0_8, %c0_9] : memref<2x32xf32, #tpu.memory_space<vmem>>, vector<2x32xf32>
    %c0_i32_10 = arith.constant 0 : i32
    %cst = arith.constant dense<0.000000e+00> : vector<2x32xf32>
    %10 = tpu.matmul %9, %6, %cst {dimension_numbers = #tpu.dot_dimension_numbers<[1], [0], [0], [1], [0, 0, 1, 1], [], []>} : vector<2x32xf32>, vector<32x32xf32>, vector<2x32xf32> -> vector<2x32xf32>
    %cst_11 = arith.constant dense<0.000000e+00> : vector<2x32xf32>
    %11 = tpu.matmul %9, %7, %cst_11 {dimension_numbers = #tpu.dot_dimension_numbers<[1], [0], [0], [1], [0, 0, 1, 1], [], []>} : vector<2x32xf32>, vector<32x32xf32>, vector<2x32xf32> -> vector<2x32xf32>
    %cst_12 = arith.constant dense<0.000000e+00> : vector<2x32xf32>
    %12 = tpu.matmul %9, %8, %cst_12 {dimension_numbers = #tpu.dot_dimension_numbers<[1], [0], [0], [1], [0, 0, 1, 1], [], []>} : vector<2x32xf32>, vector<32x32xf32>, vector<2x32xf32> -> vector<2x32xf32>
    %13 = arith.index_cast %c0_i32_10 : i32 to index
    %c0_13 = arith.constant 0 : index
    %c0_14 = arith.constant 0 : index
    %14 = vector.load %arg2[%13, %c0_13, %c0_14] : memref<8x2x32xf32, #tpu.memory_space<vmem>>, vector<1x2x32xf32>
    %15 = vector.shape_cast %14 : vector<1x2x32xf32> to vector<2x32xf32>
    %16 = arith.addf %15, %10 : vector<2x32xf32>
    %17 = arith.negf %16 : vector<2x32xf32>
    %18 = math.exp %17 : vector<2x32xf32>
    %cst_15 = arith.constant 1.000000e+00 : f32
    %19 = vector.broadcast %cst_15 : f32 to vector<2x32xf32>
    %20 = arith.addf %19, %18 : vector<2x32xf32>
    %21 = arith.divf %19, %20 : vector<2x32xf32>
    %22 = arith.index_cast %c0_i32_10 : i32 to index
    %c0_16 = arith.constant 0 : index
    %c0_17 = arith.constant 0 : index
    %23 = vector.load %arg3[%22, %c0_16, %c0_17] : memref<8x2x32xf32, #tpu.memory_space<vmem>>, vector<1x2x32xf32>
    %24 = vector.shape_cast %23 : vector<1x2x32xf32> to vector<2x32xf32>
    %25 = arith.addf %24, %11 : vector<2x32xf32>
    %26 = arith.negf %25 : vector<2x32xf32>
    %27 = math.exp %26 : vector<2x32xf32>
    %cst_18 = arith.constant 1.000000e+00 : f32
    %28 = vector.broadcast %cst_18 : f32 to vector<2x32xf32>
    %29 = arith.addf %28, %27 : vector<2x32xf32>
    %30 = arith.divf %28, %29 : vector<2x32xf32>
    %31 = arith.index_cast %c0_i32_10 : i32 to index
    %c0_19 = arith.constant 0 : index
    %c0_20 = arith.constant 0 : index
    %32 = vector.load %arg4[%31, %c0_19, %c0_20] : memref<8x2x32xf32, #tpu.memory_space<vmem>>, vector<1x2x32xf32>
    %33 = vector.shape_cast %32 : vector<1x2x32xf32> to vector<2x32xf32>
    %34 = arith.addf %12, %5 : vector<2x32xf32>
    %35 = arith.mulf %21, %34 : vector<2x32xf32>
    %36 = arith.addf %33, %35 : vector<2x32xf32>
    %37 = math.tanh %36 : vector<2x32xf32>
    %cst_21 = arith.constant 1.000000e+00 : f32
    %38 = vector.broadcast %cst_21 : f32 to vector<2x32xf32>
    %39 = arith.subf %38, %30 : vector<2x32xf32>
    %40 = arith.mulf %39, %37 : vector<2x32xf32>
    %41 = arith.mulf %30, %9 : vector<2x32xf32>
    %42 = arith.addf %40, %41 : vector<2x32xf32>
    %43 = arith.index_cast %c0_i32_10 : i32 to index
    %c0_22 = arith.constant 0 : index
    %c0_23 = arith.constant 0 : index
    %44 = vector.load %arg9[%43, %c0_22, %c0_23] : memref<8x2x32xf32, #tpu.memory_space<vmem>>, vector<1x2x32xf32>
    %45 = vector.shape_cast %44 : vector<1x2x32xf32> to vector<2x32xf32>
    %46 = vector.shape_cast %42 : vector<2x32xf32> to vector<1x2x32xf32>
    tpu.vector_store %arg9[%43, %c0_22, %c0_23], %46 {strides = array<i32>} : memref<8x2x32xf32, #tpu.memory_space<vmem>>, vector<1x2x32xf32>,
    %c1_i32 = arith.constant 1 : i32
    %cst_24 = arith.constant dense<0.000000e+00> : vector<2x32xf32>
    %47 = tpu.matmul %42, %6, %cst_24 {dimension_numbers = #tpu.dot_dimension_numbers<[1], [0], [0], [1], [0, 0, 1, 1], [], []>} : vector<2x32xf32>, vector<32x32xf32>, vector<2x32xf32> -> vector<2x32xf32>
    %cst_25 = arith.constant dense<0.000000e+00> : vector<2x32xf32>
    %48 = tpu.matmul %42, %7, %cst_25 {dimension_numbers = #tpu.dot_dimension_numbers<[1], [0], [0], [1], [0, 0, 1, 1], [], []>} : vector<2x32xf32>, vector<32x32xf32>, vector<2x32xf32> -> vector<2x32xf32>
    %cst_26 = arith.constant dense<0.000000e+00> : vector<2x32xf32>
    %49 = tpu.matmul %42, %8, %cst_26 {dimension_numbers = #tpu.dot_dimension_numbers<[1], [0], [0], [1], [0, 0, 1, 1], [], []>} : vector<2x32xf32>, vector<32x32xf32>, vector<2x32xf32> -> vector<2x32xf32>
    %50 = arith.index_cast %c1_i32 : i32 to index
    %c0_27 = arith.constant 0 : index
    %c0_28 = arith.constant 0 : index
    %51 = vector.load %arg2[%50, %c0_27, %c0_28] : memref<8x2x32xf32, #tpu.memory_space<vmem>>, vector<1x2x32xf32>
    %52 = vector.shape_cast %51 : vector<1x2x32xf32> to vector<2x32xf32>
    %53 = arith.addf %52, %47 : vector<2x32xf32>
    %54 = arith.negf %53 : vector<2x32xf32>
    %55 = math.exp %54 : vector<2x32xf32>
    %cst_29 = arith.constant 1.000000e+00 : f32
    %56 = vector.broadcast %cst_29 : f32 to vector<2x32xf32>
    %57 = arith.addf %56, %55 : vector<2x32xf32>
    %58 = arith.divf %56, %57 : vector<2x32xf32>
    %59 = arith.index_cast %c1_i32 : i32 to index
    %c0_30 = arith.constant 0 : index
    %c0_31 = arith.constant 0 : index
    %60 = vector.load %arg3[%59, %c0_30, %c0_31] : memref<8x2x32xf32, #tpu.memory_space<vmem>>, vector<1x2x32xf32>
    %61 = vector.shape_cast %60 : vector<1x2x32xf32> to vector<2x32xf32>
    %62 = arith.addf %61, %48 : vector<2x32xf32>
    %63 = arith.negf %62 : vector<2x32xf32>
    %64 = math.exp %63 : vector<2x32xf32>
    %cst_32 = arith.constant 1.000000e+00 : f32
    %65 = vector.broadcast %cst_32 : f32 to vector<2x32xf32>
    %66 = arith.addf %65, %64 : vector<2x32xf32>
    %67 = arith.divf %65, %66 : vector<2x32xf32>
    %68 = arith.index_cast %c1_i32 : i32 to index
    %c0_33 = arith.constant 0 : index
    %c0_34 = arith.constant 0 : index
    %69 = vector.load %arg4[%68, %c0_33, %c0_34] : memref<8x2x32xf32, #tpu.memory_space<vmem>>, vector<1x2x32xf32>
    %70 = vector.shape_cast %69 : vector<1x2x32xf32> to vector<2x32xf32>
    %71 = arith.addf %49, %5 : vector<2x32xf32>
    %72 = arith.mulf %58, %71 : vector<2x32xf32>
    %73 = arith.addf %70, %72 : vector<2x32xf32>
    %74 = math.tanh %73 : vector<2x32xf32>
    %cst_35 = arith.constant 1.000000e+00 : f32
    %75 = vector.broadcast %cst_35 : f32 to vector<2x32xf32>
    %76 = arith.subf %75, %67 : vector<2x32xf32>
    %77 = arith.mulf %76, %74 : vector<2x32xf32>
    %78 = arith.mulf %67, %42 : vector<2x32xf32>
    %79 = arith.addf %77, %78 : vector<2x32xf32>
    %80 = arith.index_cast %c1_i32 : i32 to index
    %c0_36 = arith.constant 0 : index
    %c0_37 = arith.constant 0 : index
    %81 = vector.load %arg9[%80, %c0_36, %c0_37] : memref<8x2x32xf32, #tpu.memory_space<vmem>>, vector<1x2x32xf32>
    %82 = vector.shape_cast %81 : vector<1x2x32xf32> to vector<2x32xf32>
    %83 = vector.shape_cast %79 : vector<2x32xf32> to vector<1x2x32xf32>
    tpu.vector_store %arg9[%80, %c0_36, %c0_37], %83 {strides = array<i32>} : memref<8x2x32xf32, #tpu.memory_space<vmem>>, vector<1x2x32xf32>,
    %c2_i32 = arith.constant 2 : i32
    %cst_38 = arith.constant dense<0.000000e+00> : vector<2x32xf32>
    %84 = tpu.matmul %79, %6, %cst_38 {dimension_numbers = #tpu.dot_dimension_numbers<[1], [0], [0], [1], [0, 0, 1, 1], [], []>} : vector<2x32xf32>, vector<32x32xf32>, vector<2x32xf32> -> vector<2x32xf32>
    %cst_39 = arith.constant dense<0.000000e+00> : vector<2x32xf32>
    %85 = tpu.matmul %79, %7, %cst_39 {dimension_numbers = #tpu.dot_dimension_numbers<[1], [0], [0], [1], [0, 0, 1, 1], [], []>} : vector<2x32xf32>, vector<32x32xf32>, vector<2x32xf32> -> vector<2x32xf32>
    %cst_40 = arith.constant dense<0.000000e+00> : vector<2x32xf32>
    %86 = tpu.matmul %79, %8, %cst_40 {dimension_numbers = #tpu.dot_dimension_numbers<[1], [0], [0], [1], [0, 0, 1, 1], [], []>} : vector<2x32xf32>, vector<32x32xf32>, vector<2x32xf32> -> vector<2x32xf32>
    %87 = arith.index_cast %c2_i32 : i32 to index
    %c0_41 = arith.constant 0 : index
    %c0_42 = arith.constant 0 : index
    %88 = vector.load %arg2[%87, %c0_41, %c0_42] : memref<8x2x32xf32, #tpu.memory_space<vmem>>, vector<1x2x32xf32>
    %89 = vector.shape_cast %88 : vector<1x2x32xf32> to vector<2x32xf32>
    %90 = arith.addf %89, %84 : vector<2x32xf32>
    %91 = arith.negf %90 : vector<2x32xf32>
    %92 = math.exp %91 : vector<2x32xf32>
    %cst_43 = arith.constant 1.000000e+00 : f32
    %93 = vector.broadcast %cst_43 : f32 to vector<2x32xf32>
    %94 = arith.addf %93, %92 : vector<2x32xf32>
    %95 = arith.divf %93, %94 : vector<2x32xf32>
    %96 = arith.index_cast %c2_i32 : i32 to index
    %c0_44 = arith.constant 0 : index
    %c0_45 = arith.constant 0 : index
    %97 = vector.load %arg3[%96, %c0_44, %c0_45] : memref<8x2x32xf32, #tpu.memory_space<vmem>>, vector<1x2x32xf32>
    %98 = vector.shape_cast %97 : vector<1x2x32xf32> to vector<2x32xf32>
    %99 = arith.addf %98, %85 : vector<2x32xf32>
    %100 = arith.negf %99 : vector<2x32xf32>
    %101 = math.exp %100 : vector<2x32xf32>
    %cst_46 = arith.constant 1.000000e+00 : f32
    %102 = vector.broadcast %cst_46 : f32 to vector<2x32xf32>
    %103 = arith.addf %102, %101 : vector<2x32xf32>
    %104 = arith.divf %102, %103 : vector<2x32xf32>
    %105 = arith.index_cast %c2_i32 : i32 to index
    %c0_47 = arith.constant 0 : index
    %c0_48 = arith.constant 0 : index
    %106 = vector.load %arg4[%105, %c0_47, %c0_48] : memref<8x2x32xf32, #tpu.memory_space<vmem>>, vector<1x2x32xf32>
    %107 = vector.shape_cast %106 : vector<1x2x32xf32> to vector<2x32xf32>
    %108 = arith.addf %86, %5 : vector<2x32xf32>
    %109 = arith.mulf %95, %108 : vector<2x32xf32>
    %110 = arith.addf %107, %109 : vector<2x32xf32>
    %111 = math.tanh %110 : vector<2x32xf32>
    %cst_49 = arith.constant 1.000000e+00 : f32
    %112 = vector.broadcast %cst_49 : f32 to vector<2x32xf32>
    %113 = arith.subf %112, %104 : vector<2x32xf32>
    %114 = arith.mulf %113, %111 : vector<2x32xf32>
    %115 = arith.mulf %104, %79 : vector<2x32xf32>
    %116 = arith.addf %114, %115 : vector<2x32xf32>
    %117 = arith.index_cast %c2_i32 : i32 to index
    %c0_50 = arith.constant 0 : index
    %c0_51 = arith.constant 0 : index
    %118 = vector.load %arg9[%117, %c0_50, %c0_51] : memref<8x2x32xf32, #tpu.memory_space<vmem>>, vector<1x2x32xf32>
    %119 = vector.shape_cast %118 : vector<1x2x32xf32> to vector<2x32xf32>
    %120 = vector.shape_cast %116 : vector<2x32xf32> to vector<1x2x32xf32>
    tpu.vector_store %arg9[%117, %c0_50, %c0_51], %120 {strides = array<i32>} : memref<8x2x32xf32, #tpu.memory_space<vmem>>, vector<1x2x32xf32>,
    %c3_i32 = arith.constant 3 : i32
    %cst_52 = arith.constant dense<0.000000e+00> : vector<2x32xf32>
    %121 = tpu.matmul %116, %6, %cst_52 {dimension_numbers = #tpu.dot_dimension_numbers<[1], [0], [0], [1], [0, 0, 1, 1], [], []>} : vector<2x32xf32>, vector<32x32xf32>, vector<2x32xf32> -> vector<2x32xf32>
    %cst_53 = arith.constant dense<0.000000e+00> : vector<2x32xf32>
    %122 = tpu.matmul %116, %7, %cst_53 {dimension_numbers = #tpu.dot_dimension_numbers<[1], [0], [0], [1], [0, 0, 1, 1], [], []>} : vector<2x32xf32>, vector<32x32xf32>, vector<2x32xf32> -> vector<2x32xf32>
    %cst_54 = arith.constant dense<0.000000e+00> : vector<2x32xf32>
    %123 = tpu.matmul %116, %8, %cst_54 {dimension_numbers = #tpu.dot_dimension_numbers<[1], [0], [0], [1], [0, 0, 1, 1], [], []>} : vector<2x32xf32>, vector<32x32xf32>, vector<2x32xf32> -> vector<2x32xf32>
    %124 = arith.index_cast %c3_i32 : i32 to index
    %c0_55 = arith.constant 0 : index
    %c0_56 = arith.constant 0 : index
    %125 = vector.load %arg2[%124, %c0_55, %c0_56] : memref<8x2x32xf32, #tpu.memory_space<vmem>>, vector<1x2x32xf32>
    %126 = vector.shape_cast %125 : vector<1x2x32xf32> to vector<2x32xf32>
    %127 = arith.addf %126, %121 : vector<2x32xf32>
    %128 = arith.negf %127 : vector<2x32xf32>
    %129 = math.exp %128 : vector<2x32xf32>
    %cst_57 = arith.constant 1.000000e+00 : f32
    %130 = vector.broadcast %cst_57 : f32 to vector<2x32xf32>
    %131 = arith.addf %130, %129 : vector<2x32xf32>
    %132 = arith.divf %130, %131 : vector<2x32xf32>
    %133 = arith.index_cast %c3_i32 : i32 to index
    %c0_58 = arith.constant 0 : index
    %c0_59 = arith.constant 0 : index
    %134 = vector.load %arg3[%133, %c0_58, %c0_59] : memref<8x2x32xf32, #tpu.memory_space<vmem>>, vector<1x2x32xf32>
    %135 = vector.shape_cast %134 : vector<1x2x32xf32> to vector<2x32xf32>
    %136 = arith.addf %135, %122 : vector<2x32xf32>
    %137 = arith.negf %136 : vector<2x32xf32>
    %138 = math.exp %137 : vector<2x32xf32>
    %cst_60 = arith.constant 1.000000e+00 : f32
    %139 = vector.broadcast %cst_60 : f32 to vector<2x32xf32>
    %140 = arith.addf %139, %138 : vector<2x32xf32>
    %141 = arith.divf %139, %140 : vector<2x32xf32>
    %142 = arith.index_cast %c3_i32 : i32 to index
    %c0_61 = arith.constant 0 : index
    %c0_62 = arith.constant 0 : index
    %143 = vector.load %arg4[%142, %c0_61, %c0_62] : memref<8x2x32xf32, #tpu.memory_space<vmem>>, vector<1x2x32xf32>
    %144 = vector.shape_cast %143 : vector<1x2x32xf32> to vector<2x32xf32>
    %145 = arith.addf %123, %5 : vector<2x32xf32>
    %146 = arith.mulf %132, %145 : vector<2x32xf32>
    %147 = arith.addf %144, %146 : vector<2x32xf32>
    %148 = math.tanh %147 : vector<2x32xf32>
    %cst_63 = arith.constant 1.000000e+00 : f32
    %149 = vector.broadcast %cst_63 : f32 to vector<2x32xf32>
    %150 = arith.subf %149, %141 : vector<2x32xf32>
    %151 = arith.mulf %150, %148 : vector<2x32xf32>
    %152 = arith.mulf %141, %116 : vector<2x32xf32>
    %153 = arith.addf %151, %152 : vector<2x32xf32>
    %154 = arith.index_cast %c3_i32 : i32 to index
    %c0_64 = arith.constant 0 : index
    %c0_65 = arith.constant 0 : index
    %155 = vector.load %arg9[%154, %c0_64, %c0_65] : memref<8x2x32xf32, #tpu.memory_space<vmem>>, vector<1x2x32xf32>
    %156 = vector.shape_cast %155 : vector<1x2x32xf32> to vector<2x32xf32>
    %157 = vector.shape_cast %153 : vector<2x32xf32> to vector<1x2x32xf32>
    tpu.vector_store %arg9[%154, %c0_64, %c0_65], %157 {strides = array<i32>} : memref<8x2x32xf32, #tpu.memory_space<vmem>>, vector<1x2x32xf32>,
    %c4_i32 = arith.constant 4 : i32
    %cst_66 = arith.constant dense<0.000000e+00> : vector<2x32xf32>
    %158 = tpu.matmul %153, %6, %cst_66 {dimension_numbers = #tpu.dot_dimension_numbers<[1], [0], [0], [1], [0, 0, 1, 1], [], []>} : vector<2x32xf32>, vector<32x32xf32>, vector<2x32xf32> -> vector<2x32xf32>
    %cst_67 = arith.constant dense<0.000000e+00> : vector<2x32xf32>
    %159 = tpu.matmul %153, %7, %cst_67 {dimension_numbers = #tpu.dot_dimension_numbers<[1], [0], [0], [1], [0, 0, 1, 1], [], []>} : vector<2x32xf32>, vector<32x32xf32>, vector<2x32xf32> -> vector<2x32xf32>
    %cst_68 = arith.constant dense<0.000000e+00> : vector<2x32xf32>
    %160 = tpu.matmul %153, %8, %cst_68 {dimension_numbers = #tpu.dot_dimension_numbers<[1], [0], [0], [1], [0, 0, 1, 1], [], []>} : vector<2x32xf32>, vector<32x32xf32>, vector<2x32xf32> -> vector<2x32xf32>
    %161 = arith.index_cast %c4_i32 : i32 to index
    %c0_69 = arith.constant 0 : index
    %c0_70 = arith.constant 0 : index
    %162 = vector.load %arg2[%161, %c0_69, %c0_70] : memref<8x2x32xf32, #tpu.memory_space<vmem>>, vector<1x2x32xf32>
    %163 = vector.shape_cast %162 : vector<1x2x32xf32> to vector<2x32xf32>
    %164 = arith.addf %163, %158 : vector<2x32xf32>
    %165 = arith.negf %164 : vector<2x32xf32>
    %166 = math.exp %165 : vector<2x32xf32>
    %cst_71 = arith.constant 1.000000e+00 : f32
    %167 = vector.broadcast %cst_71 : f32 to vector<2x32xf32>
    %168 = arith.addf %167, %166 : vector<2x32xf32>
    %169 = arith.divf %167, %168 : vector<2x32xf32>
    %170 = arith.index_cast %c4_i32 : i32 to index
    %c0_72 = arith.constant 0 : index
    %c0_73 = arith.constant 0 : index
    %171 = vector.load %arg3[%170, %c0_72, %c0_73] : memref<8x2x32xf32, #tpu.memory_space<vmem>>, vector<1x2x32xf32>
    %172 = vector.shape_cast %171 : vector<1x2x32xf32> to vector<2x32xf32>
    %173 = arith.addf %172, %159 : vector<2x32xf32>
    %174 = arith.negf %173 : vector<2x32xf32>
    %175 = math.exp %174 : vector<2x32xf32>
    %cst_74 = arith.constant 1.000000e+00 : f32
    %176 = vector.broadcast %cst_74 : f32 to vector<2x32xf32>
    %177 = arith.addf %176, %175 : vector<2x32xf32>
    %178 = arith.divf %176, %177 : vector<2x32xf32>
    %179 = arith.index_cast %c4_i32 : i32 to index
    %c0_75 = arith.constant 0 : index
    %c0_76 = arith.constant 0 : index
    %180 = vector.load %arg4[%179, %c0_75, %c0_76] : memref<8x2x32xf32, #tpu.memory_space<vmem>>, vector<1x2x32xf32>
    %181 = vector.shape_cast %180 : vector<1x2x32xf32> to vector<2x32xf32>
    %182 = arith.addf %160, %5 : vector<2x32xf32>
    %183 = arith.mulf %169, %182 : vector<2x32xf32>
    %184 = arith.addf %181, %183 : vector<2x32xf32>
    %185 = math.tanh %184 : vector<2x32xf32>
    %cst_77 = arith.constant 1.000000e+00 : f32
    %186 = vector.broadcast %cst_77 : f32 to vector<2x32xf32>
    %187 = arith.subf %186, %178 : vector<2x32xf32>
    %188 = arith.mulf %187, %185 : vector<2x32xf32>
    %189 = arith.mulf %178, %153 : vector<2x32xf32>
    %190 = arith.addf %188, %189 : vector<2x32xf32>
    %191 = arith.index_cast %c4_i32 : i32 to index
    %c0_78 = arith.constant 0 : index
    %c0_79 = arith.constant 0 : index
    %192 = vector.load %arg9[%191, %c0_78, %c0_79] : memref<8x2x32xf32, #tpu.memory_space<vmem>>, vector<1x2x32xf32>
    %193 = vector.shape_cast %192 : vector<1x2x32xf32> to vector<2x32xf32>
    %194 = vector.shape_cast %190 : vector<2x32xf32> to vector<1x2x32xf32>
    tpu.vector_store %arg9[%191, %c0_78, %c0_79], %194 {strides = array<i32>} : memref<8x2x32xf32, #tpu.memory_space<vmem>>, vector<1x2x32xf32>,
    %c5_i32 = arith.constant 5 : i32
    %cst_80 = arith.constant dense<0.000000e+00> : vector<2x32xf32>
    %195 = tpu.matmul %190, %6, %cst_80 {dimension_numbers = #tpu.dot_dimension_numbers<[1], [0], [0], [1], [0, 0, 1, 1], [], []>} : vector<2x32xf32>, vector<32x32xf32>, vector<2x32xf32> -> vector<2x32xf32>
    %cst_81 = arith.constant dense<0.000000e+00> : vector<2x32xf32>
    %196 = tpu.matmul %190, %7, %cst_81 {dimension_numbers = #tpu.dot_dimension_numbers<[1], [0], [0], [1], [0, 0, 1, 1], [], []>} : vector<2x32xf32>, vector<32x32xf32>, vector<2x32xf32> -> vector<2x32xf32>
    %cst_82 = arith.constant dense<0.000000e+00> : vector<2x32xf32>
    %197 = tpu.matmul %190, %8, %cst_82 {dimension_numbers = #tpu.dot_dimension_numbers<[1], [0], [0], [1], [0, 0, 1, 1], [], []>} : vector<2x32xf32>, vector<32x32xf32>, vector<2x32xf32> -> vector<2x32xf32>
    %198 = arith.index_cast %c5_i32 : i32 to index
    %c0_83 = arith.constant 0 : index
    %c0_84 = arith.constant 0 : index
    %199 = vector.load %arg2[%198, %c0_83, %c0_84] : memref<8x2x32xf32, #tpu.memory_space<vmem>>, vector<1x2x32xf32>
    %200 = vector.shape_cast %199 : vector<1x2x32xf32> to vector<2x32xf32>
    %201 = arith.addf %200, %195 : vector<2x32xf32>
    %202 = arith.negf %201 : vector<2x32xf32>
    %203 = math.exp %202 : vector<2x32xf32>
    %cst_85 = arith.constant 1.000000e+00 : f32
    %204 = vector.broadcast %cst_85 : f32 to vector<2x32xf32>
    %205 = arith.addf %204, %203 : vector<2x32xf32>
    %206 = arith.divf %204, %205 : vector<2x32xf32>
    %207 = arith.index_cast %c5_i32 : i32 to index
    %c0_86 = arith.constant 0 : index
    %c0_87 = arith.constant 0 : index
    %208 = vector.load %arg3[%207, %c0_86, %c0_87] : memref<8x2x32xf32, #tpu.memory_space<vmem>>, vector<1x2x32xf32>
    %209 = vector.shape_cast %208 : vector<1x2x32xf32> to vector<2x32xf32>
    %210 = arith.addf %209, %196 : vector<2x32xf32>
    %211 = arith.negf %210 : vector<2x32xf32>
    %212 = math.exp %211 : vector<2x32xf32>
    %cst_88 = arith.constant 1.000000e+00 : f32
    %213 = vector.broadcast %cst_88 : f32 to vector<2x32xf32>
    %214 = arith.addf %213, %212 : vector<2x32xf32>
    %215 = arith.divf %213, %214 : vector<2x32xf32>
    %216 = arith.index_cast %c5_i32 : i32 to index
    %c0_89 = arith.constant 0 : index
    %c0_90 = arith.constant 0 : index
    %217 = vector.load %arg4[%216, %c0_89, %c0_90] : memref<8x2x32xf32, #tpu.memory_space<vmem>>, vector<1x2x32xf32>
    %218 = vector.shape_cast %217 : vector<1x2x32xf32> to vector<2x32xf32>
    %219 = arith.addf %197, %5 : vector<2x32xf32>
    %220 = arith.mulf %206, %219 : vector<2x32xf32>
    %221 = arith.addf %218, %220 : vector<2x32xf32>
    %222 = math.tanh %221 : vector<2x32xf32>
    %cst_91 = arith.constant 1.000000e+00 : f32
    %223 = vector.broadcast %cst_91 : f32 to vector<2x32xf32>
    %224 = arith.subf %223, %215 : vector<2x32xf32>
    %225 = arith.mulf %224, %222 : vector<2x32xf32>
    %226 = arith.mulf %215, %190 : vector<2x32xf32>
    %227 = arith.addf %225, %226 : vector<2x32xf32>
    %228 = arith.index_cast %c5_i32 : i32 to index
    %c0_92 = arith.constant 0 : index
    %c0_93 = arith.constant 0 : index
    %229 = vector.load %arg9[%228, %c0_92, %c0_93] : memref<8x2x32xf32, #tpu.memory_space<vmem>>, vector<1x2x32xf32>
    %230 = vector.shape_cast %229 : vector<1x2x32xf32> to vector<2x32xf32>
    %231 = vector.shape_cast %227 : vector<2x32xf32> to vector<1x2x32xf32>
    tpu.vector_store %arg9[%228, %c0_92, %c0_93], %231 {strides = array<i32>} : memref<8x2x32xf32, #tpu.memory_space<vmem>>, vector<1x2x32xf32>,
    %c6_i32 = arith.constant 6 : i32
    %cst_94 = arith.constant dense<0.000000e+00> : vector<2x32xf32>
    %232 = tpu.matmul %227, %6, %cst_94 {dimension_numbers = #tpu.dot_dimension_numbers<[1], [0], [0], [1], [0, 0, 1, 1], [], []>} : vector<2x32xf32>, vector<32x32xf32>, vector<2x32xf32> -> vector<2x32xf32>
    %cst_95 = arith.constant dense<0.000000e+00> : vector<2x32xf32>
    %233 = tpu.matmul %227, %7, %cst_95 {dimension_numbers = #tpu.dot_dimension_numbers<[1], [0], [0], [1], [0, 0, 1, 1], [], []>} : vector<2x32xf32>, vector<32x32xf32>, vector<2x32xf32> -> vector<2x32xf32>
    %cst_96 = arith.constant dense<0.000000e+00> : vector<2x32xf32>
    %234 = tpu.matmul %227, %8, %cst_96 {dimension_numbers = #tpu.dot_dimension_numbers<[1], [0], [0], [1], [0, 0, 1, 1], [], []>} : vector<2x32xf32>, vector<32x32xf32>, vector<2x32xf32> -> vector<2x32xf32>
    %235 = arith.index_cast %c6_i32 : i32 to index
    %c0_97 = arith.constant 0 : index
    %c0_98 = arith.constant 0 : index
    %236 = vector.load %arg2[%235, %c0_97, %c0_98] : memref<8x2x32xf32, #tpu.memory_space<vmem>>, vector<1x2x32xf32>
    %237 = vector.shape_cast %236 : vector<1x2x32xf32> to vector<2x32xf32>
    %238 = arith.addf %237, %232 : vector<2x32xf32>
    %239 = arith.negf %238 : vector<2x32xf32>
    %240 = math.exp %239 : vector<2x32xf32>
    %cst_99 = arith.constant 1.000000e+00 : f32
    %241 = vector.broadcast %cst_99 : f32 to vector<2x32xf32>
    %242 = arith.addf %241, %240 : vector<2x32xf32>
    %243 = arith.divf %241, %242 : vector<2x32xf32>
    %244 = arith.index_cast %c6_i32 : i32 to index
    %c0_100 = arith.constant 0 : index
    %c0_101 = arith.constant 0 : index
    %245 = vector.load %arg3[%244, %c0_100, %c0_101] : memref<8x2x32xf32, #tpu.memory_space<vmem>>, vector<1x2x32xf32>
    %246 = vector.shape_cast %245 : vector<1x2x32xf32> to vector<2x32xf32>
    %247 = arith.addf %246, %233 : vector<2x32xf32>
    %248 = arith.negf %247 : vector<2x32xf32>
    %249 = math.exp %248 : vector<2x32xf32>
    %cst_102 = arith.constant 1.000000e+00 : f32
    %250 = vector.broadcast %cst_102 : f32 to vector<2x32xf32>
    %251 = arith.addf %250, %249 : vector<2x32xf32>
    %252 = arith.divf %250, %251 : vector<2x32xf32>
    %253 = arith.index_cast %c6_i32 : i32 to index
    %c0_103 = arith.constant 0 : index
    %c0_104 = arith.constant 0 : index
    %254 = vector.load %arg4[%253, %c0_103, %c0_104] : memref<8x2x32xf32, #tpu.memory_space<vmem>>, vector<1x2x32xf32>
    %255 = vector.shape_cast %254 : vector<1x2x32xf32> to vector<2x32xf32>
    %256 = arith.addf %234, %5 : vector<2x32xf32>
    %257 = arith.mulf %243, %256 : vector<2x32xf32>
    %258 = arith.addf %255, %257 : vector<2x32xf32>
    %259 = math.tanh %258 : vector<2x32xf32>
    %cst_105 = arith.constant 1.000000e+00 : f32
    %260 = vector.broadcast %cst_105 : f32 to vector<2x32xf32>
    %261 = arith.subf %260, %252 : vector<2x32xf32>
    %262 = arith.mulf %261, %259 : vector<2x32xf32>
    %263 = arith.mulf %252, %227 : vector<2x32xf32>
    %264 = arith.addf %262, %263 : vector<2x32xf32>
    %265 = arith.index_cast %c6_i32 : i32 to index
    %c0_106 = arith.constant 0 : index
    %c0_107 = arith.constant 0 : index
    %266 = vector.load %arg9[%265, %c0_106, %c0_107] : memref<8x2x32xf32, #tpu.memory_space<vmem>>, vector<1x2x32xf32>
    %267 = vector.shape_cast %266 : vector<1x2x32xf32> to vector<2x32xf32>
    %268 = vector.shape_cast %264 : vector<2x32xf32> to vector<1x2x32xf32>
    tpu.vector_store %arg9[%265, %c0_106, %c0_107], %268 {strides = array<i32>} : memref<8x2x32xf32, #tpu.memory_space<vmem>>, vector<1x2x32xf32>,
    %c7_i32 = arith.constant 7 : i32
    %cst_108 = arith.constant dense<0.000000e+00> : vector<2x32xf32>
    %269 = tpu.matmul %264, %6, %cst_108 {dimension_numbers = #tpu.dot_dimension_numbers<[1], [0], [0], [1], [0, 0, 1, 1], [], []>} : vector<2x32xf32>, vector<32x32xf32>, vector<2x32xf32> -> vector<2x32xf32>
    %cst_109 = arith.constant dense<0.000000e+00> : vector<2x32xf32>
    %270 = tpu.matmul %264, %7, %cst_109 {dimension_numbers = #tpu.dot_dimension_numbers<[1], [0], [0], [1], [0, 0, 1, 1], [], []>} : vector<2x32xf32>, vector<32x32xf32>, vector<2x32xf32> -> vector<2x32xf32>
    %cst_110 = arith.constant dense<0.000000e+00> : vector<2x32xf32>
    %271 = tpu.matmul %264, %8, %cst_110 {dimension_numbers = #tpu.dot_dimension_numbers<[1], [0], [0], [1], [0, 0, 1, 1], [], []>} : vector<2x32xf32>, vector<32x32xf32>, vector<2x32xf32> -> vector<2x32xf32>
    %272 = arith.index_cast %c7_i32 : i32 to index
    %c0_111 = arith.constant 0 : index
    %c0_112 = arith.constant 0 : index
    %273 = vector.load %arg2[%272, %c0_111, %c0_112] : memref<8x2x32xf32, #tpu.memory_space<vmem>>, vector<1x2x32xf32>
    %274 = vector.shape_cast %273 : vector<1x2x32xf32> to vector<2x32xf32>
    %275 = arith.addf %274, %269 : vector<2x32xf32>
    %276 = arith.negf %275 : vector<2x32xf32>
    %277 = math.exp %276 : vector<2x32xf32>
    %cst_113 = arith.constant 1.000000e+00 : f32
    %278 = vector.broadcast %cst_113 : f32 to vector<2x32xf32>
    %279 = arith.addf %278, %277 : vector<2x32xf32>
    %280 = arith.divf %278, %279 : vector<2x32xf32>
    %281 = arith.index_cast %c7_i32 : i32 to index
    %c0_114 = arith.constant 0 : index
    %c0_115 = arith.constant 0 : index
    %282 = vector.load %arg3[%281, %c0_114, %c0_115] : memref<8x2x32xf32, #tpu.memory_space<vmem>>, vector<1x2x32xf32>
    %283 = vector.shape_cast %282 : vector<1x2x32xf32> to vector<2x32xf32>
    %284 = arith.addf %283, %270 : vector<2x32xf32>
    %285 = arith.negf %284 : vector<2x32xf32>
    %286 = math.exp %285 : vector<2x32xf32>
    %cst_116 = arith.constant 1.000000e+00 : f32
    %287 = vector.broadcast %cst_116 : f32 to vector<2x32xf32>
    %288 = arith.addf %287, %286 : vector<2x32xf32>
    %289 = arith.divf %287, %288 : vector<2x32xf32>
    %290 = arith.index_cast %c7_i32 : i32 to index
    %c0_117 = arith.constant 0 : index
    %c0_118 = arith.constant 0 : index
    %291 = vector.load %arg4[%290, %c0_117, %c0_118] : memref<8x2x32xf32, #tpu.memory_space<vmem>>, vector<1x2x32xf32>
    %292 = vector.shape_cast %291 : vector<1x2x32xf32> to vector<2x32xf32>
    %293 = arith.addf %271, %5 : vector<2x32xf32>
    %294 = arith.mulf %280, %293 : vector<2x32xf32>
    %295 = arith.addf %292, %294 : vector<2x32xf32>
    %296 = math.tanh %295 : vector<2x32xf32>
    %cst_119 = arith.constant 1.000000e+00 : f32
    %297 = vector.broadcast %cst_119 : f32 to vector<2x32xf32>
    %298 = arith.subf %297, %289 : vector<2x32xf32>
    %299 = arith.mulf %298, %296 : vector<2x32xf32>
    %300 = arith.mulf %289, %264 : vector<2x32xf32>
    %301 = arith.addf %299, %300 : vector<2x32xf32>
    %302 = arith.index_cast %c7_i32 : i32 to index
    %c0_120 = arith.constant 0 : index
    %c0_121 = arith.constant 0 : index
    %303 = vector.load %arg9[%302, %c0_120, %c0_121] : memref<8x2x32xf32, #tpu.memory_space<vmem>>, vector<1x2x32xf32>
    %304 = vector.shape_cast %303 : vector<1x2x32xf32> to vector<2x32xf32>
    %305 = vector.shape_cast %301 : vector<2x32xf32> to vector<1x2x32xf32>
    tpu.vector_store %arg9[%302, %c0_120, %c0_121], %305 {strides = array<i32>} : memref<8x2x32xf32, #tpu.memory_space<vmem>>, vector<1x2x32xf32>,
    %c8_i32 = arith.constant 8 : i32
    %c0_122 = arith.constant 0 : index
    %c0_123 = arith.constant 0 : index
    %306 = vector.load %arg10[%c0_122, %c0_123] : memref<2x32xf32, #tpu.memory_space<vmem>>, vector<2x32xf32>
    tpu.vector_store %arg10[%c0_122, %c0_123], %301 {strides = array<i32>} : memref<2x32xf32, #tpu.memory_space<vmem>>, vector<2x32xf32>,
    return
  }
  func.func @transform_0(%arg0: i32, %arg1: i32) -> (i32, i32, i32) {
    %c0_i32 = arith.constant 0 : i32
    %c0_i32_0 = arith.constant 0 : i32
    return %arg1, %arg0, %c0_i32 : i32, i32, i32
  }
  func.func @transform_1(%arg0: i32, %arg1: i32) -> (i32, i32, i32) {
    %c0_i32 = arith.constant 0 : i32
    %c0_i32_0 = arith.constant 0 : i32
    return %arg1, %arg0, %c0_i32 : i32, i32, i32
  }
  func.func @transform_2(%arg0: i32, %arg1: i32) -> (i32, i32, i32) {
    %c0_i32 = arith.constant 0 : i32
    %c0_i32_0 = arith.constant 0 : i32
    return %arg1, %arg0, %c0_i32 : i32, i32, i32
  }
  func.func @transform_3(%arg0: i32, %arg1: i32) -> (i32, i32) {
    %c0_i32 = arith.constant 0 : i32
    %c0_i32_0 = arith.constant 0 : i32
    %c0_i32_1 = arith.constant 0 : i32
    return %c0_i32, %c0_i32_0 : i32, i32
  }
  func.func @transform_4(%arg0: i32, %arg1: i32) -> (i32, i32) {
    %c0_i32 = arith.constant 0 : i32
    %c0_i32_0 = arith.constant 0 : i32
    %c0_i32_1 = arith.constant 0 : i32
    return %c0_i32, %c0_i32_0 : i32, i32
  }
  func.func @transform_5(%arg0: i32, %arg1: i32) -> (i32, i32) {
    %c0_i32 = arith.constant 0 : i32
    %c0_i32_0 = arith.constant 0 : i32
    %c0_i32_1 = arith.constant 0 : i32
    return %c0_i32, %c0_i32_0 : i32, i32
  }
  func.func @transform_6(%arg0: i32, %arg1: i32) -> (i32, i32) {
    %c0_i32 = arith.constant 0 : i32
    %c0_i32_0 = arith.constant 0 : i32
    %c0_i32_1 = arith.constant 0 : i32
    return %c0_i32, %c0_i32_0 : i32, i32
  }
  func.func @transform_7(%arg0: i32, %arg1: i32) -> (i32, i32, i32) {
    %c0_i32 = arith.constant 0 : i32
    %c0_i32_0 = arith.constant 0 : i32
    return %arg1, %arg0, %c0_i32 : i32, i32, i32
  }
}

</mosaic_0001>

<llo_original>
// kernel: tpu_custom_call.1
$region0: #{tpu_custom_call.1}
  #allocation0 [shape = 'u32[]', space=smem, size = 0x4, offset = 0x4, fixed_abs, tag = 'smem constant byte address 0x4 - core index']
  #allocation1 [shape = 'u32[72,128]{1,0:T(1,128)}', space=vmem, size = 0x9000, scoped, tag = 'internal scratch']
  #allocation2 [shape = 'f32[2,32]{1,0:T(2,128)}', space=vmem, size = 0x400, scoped, tag = 'scratch operand']
  %s0 = inlined_call_operand.hbm [shape: f32[16,2,32], index: 0, kind: input, shape index: {}]
  %s1 = inlined_call_operand.hbm [shape: f32[16,2,32], index: 1, kind: input, shape index: {}]
  %s2 = inlined_call_operand.hbm [shape: f32[16,2,32], index: 2, kind: input, shape index: {}]
  %s3 = inlined_call_operand.hbm [shape: f32[32,32], index: 3, kind: input, shape index: {}]
  %s4 = inlined_call_operand.hbm [shape: f32[32,32], index: 4, kind: input, shape index: {}]
  %s5 = inlined_call_operand.hbm [shape: f32[32,32], index: 5, kind: input, shape index: {}]
  %s6 = inlined_call_operand.vmem [shape: f32[1,32], index: 6, kind: input, shape index: {}]
  %s7 = inlined_call_operand.hbm [shape: f32[16,2,32], index: 7, kind: output, shape index: {}]
  %s8 = sld [smem:[#allocation0]]
  $region89: #{tpu_custom_call.1} parent=0
    _
  %s10 = ssub.s32 1, %s8
  %s11 = scalar_select 0, %s10, %s8
  $region1: #{tpu_custom_call.1} parent=0
    #allocation3 [shape = 'u8[16384]{0}', space=vmem, size = 0x4000, scoped, tag = 'input window, operand 0']
    #allocation4 [shape = 's32[2]{0}', space=sflag, size = 0x8, scoped, tag = 'scoped memory for tpu_custom_call.1']
    #allocation5 [shape = 's32[2]{0}', space=sflag, size = 0x8, scoped, tag = 'scoped memory for tpu_custom_call.1']
    #allocation6 [shape = 'u8[16384]{0}', space=vmem, size = 0x4000, scoped, tag = 'input window, operand 1']
    #allocation7 [shape = 's32[2]{0}', space=sflag, size = 0x8, scoped, tag = 'scoped memory for tpu_custom_call.1']
    #allocation8 [shape = 'u8[16384]{0}', space=vmem, size = 0x4000, scoped, tag = 'input window, operand 2']
    #allocation9 [shape = 'u8[16384]{0}', space=vmem, size = 0x4000, scoped, tag = 'input window, operand 3, single buffered']
    #allocation10 [shape = 's32[1]{0}', space=sflag, size = 0x4, scoped, tag = 'scoped memory for tpu_custom_call.1']
    #allocation11 [shape = 'u8[16384]{0}', space=vmem, size = 0x4000, scoped, tag = 'input window, operand 4, single buffered']
    #allocation12 [shape = 'u8[16384]{0}', space=vmem, size = 0x4000, scoped, tag = 'input window, operand 5, single buffered']
    #allocation13 [shape = 's32[1]{0}', space=sflag, size = 0x4, scoped, tag = 'scoped memory for tpu_custom_call.1']
    #allocation14 [shape = 'u8[16384]{0}', space=vmem, size = 0x4000, scoped, tag = 'output window, operand 0']
    %12 = vsyncpa [#allocation4], 0
    %s13 = scalar_lea.sflag [#allocation4], 1
    %14 = vsyncpa %s13, 0
    %15 = vsyncpa [#allocation7], 0
    %s16 = scalar_lea.sflag [#allocation7], 1
    %17 = vsyncpa %s16, 0
    %18 = vsyncpa [#allocation10], 0
    %19 = vsyncpa [#allocation13], 0
    %20 = vsyncpa [#allocation5], 0
    %s21 = scalar_lea.sflag [#allocation5], 1
    %22 = vsyncpa %s21, 0
    loop: start=0, step=1, limit=4
    $region2: #{tpu_custom_call.1} parent=1 // loop_pre_header
      _
    $region3: #{tpu_custom_call.1} parent=1 // loop_header
      %s24 = sphi 0, %s28
      %p25 = scmp.ge.s32.totalorder %s24, 4
      %s31 = sphi 0, %s43
      %s32 = sphi 0, %s39
      %s33 = sphi 0, %s31
      %s34 = sphi 0, %s32
      %s35 = sphi 0, %s33
      %s36 = sphi 0, %s34
      %s48 = sphi 0, %s50
      %s51 = sphi 0, %s48
      %s52 = sphi 0, %s51
      %s68 = sphi 0, %s52
      %s76 = sphi 0, %s78
      %s79 = sphi 0, %s76
      %s80 = sphi 0, %s79
      %s96 = sphi 0, %s80
      %s104 = sphi 0, %s106
      %s107 = sphi 0, %s104
      %s108 = sphi 0, %s107
      %s124 = sphi 0, %s108
      %s128 = sphi 0, %s128
      %s130 = sphi 0, %s128
      %s131 = sphi 0, %s130
      %s145 = sphi 0, %s131
      %s149 = sphi 0, %s149
      %s151 = sphi 0, %s149
      %s152 = sphi 0, %s151
      %s166 = sphi 0, %s152
      %s170 = sphi 0, %s170
      %s172 = sphi 0, %s170
      %s173 = sphi 0, %s172
      %s187 = sphi 0, %s173
      %s191 = sphi 0, %s191
      %s193 = sphi 0, %s191
      %s194 = sphi 0, %s193
      %s208 = sphi 0, %s194
      %s216 = sphi 0, %s218
      %s219 = sphi 0, %s216
      %s220 = sphi 0, %s219
      %s236 = sphi 0, %s220
    $region4: #{tpu_custom_call.1} parent=1 // loop_header_branch
      %27 = sbr.rel (%p25) target = $region8
    $region5: #{tpu_custom_call.1} parent=1 // loop_body
      %s29 = ssub.s32 %s24, 1
      %s30 = ssub.s32 %s24, 2
      %s37 = sadd.s32 1, %s32
      %p38 = scmp.ge.s32.totalorder %s37, 2
      %s39 = scalar_select %p38, 0, %s37
      %s40 = sadd.s32 1, %s31
      %s41 = scalar_select %p38, %s40, %s31
      %p42 = scmp.ge.s32.totalorder %s41, 1
      %s43 = scalar_select %p42, 0, %s41
      %s44 = ssub.s32 %s32, %s39
      %s45 = ssub.s32 %s31, %s43
      %s46 = sor.u32 %s44, %s45
      %p47 = scmp.eq.s32.totalorder %s46, 0
      %s49 = sadd.s32 %s48, 1
      %s50 = scalar_select %p47, %s48, %s49
      %p53 = pneg %p47
      %p54 = scmp.eq.s32.totalorder %s24, 1
      %p55 = por %p53, %p54
      %p56 = scmp.ne.s32.totalorder %s48, %s51
      %p57 = scmp.eq.s32.totalorder %s24, 0
      %p58 = por %p56, %p57
      %p59 = scmp.ne.s32.totalorder %s48, %s51
      %p60 = scmp.eq.s32.totalorder %s29, 1
      %p61 = por %p59, %p60
      %p62 = scmp.ne.s32.totalorder %s51, %s52
      %p63 = scmp.eq.s32.totalorder %s29, 0
      %p64 = por %p62, %p63
      %p65 = scmp.ne.s32.totalorder %s51, %s52
      %p66 = scmp.eq.s32.totalorder %s30, 1
      %p67 = por %p65, %p66
      %p69 = scmp.ne.s32.totalorder %s52, %s68
      %p70 = scmp.eq.s32.totalorder %s30, 0
      %p71 = por %p69, %p70
      %s72 = ssub.s32 %s32, %s39
      %s73 = ssub.s32 %s31, %s43
      %s74 = sor.u32 %s72, %s73
      %p75 = scmp.eq.s32.totalorder %s74, 0
      %s77 = sadd.s32 %s76, 1
      %s78 = scalar_select %p75, %s76, %s77
      %p81 = pneg %p75
      %p82 = scmp.eq.s32.totalorder %s24, 1
      %p83 = por %p81, %p82
      %p84 = scmp.ne.s32.totalorder %s76, %s79
      %p85 = scmp.eq.s32.totalorder %s24, 0
      %p86 = por %p84, %p85
      %p87 = scmp.ne.s32.totalorder %s76, %s79
      %p88 = scmp.eq.s32.totalorder %s29, 1
      %p89 = por %p87, %p88
      %p90 = scmp.ne.s32.totalorder %s79, %s80
      %p91 = scmp.eq.s32.totalorder %s29, 0
      %p92 = por %p90, %p91
      %p93 = scmp.ne.s32.totalorder %s79, %s80
      %p94 = scmp.eq.s32.totalorder %s30, 1
      %p95 = por %p93, %p94
      %p97 = scmp.ne.s32.totalorder %s80, %s96
      %p98 = scmp.eq.s32.totalorder %s30, 0
      %p99 = por %p97, %p98
      %s100 = ssub.s32 %s32, %s39
      %s101 = ssub.s32 %s31, %s43
      %s102 = sor.u32 %s100, %s101
      %p103 = scmp.eq.s32.totalorder %s102, 0
      %s105 = sadd.s32 %s104, 1
      %s106 = scalar_select %p103, %s104, %s105
      %p109 = pneg %p103
      %p110 = scmp.eq.s32.totalorder %s24, 1
      %p111 = por %p109, %p110
      %p112 = scmp.ne.s32.totalorder %s104, %s107
      %p113 = scmp.eq.s32.totalorder %s24, 0
      %p114 = por %p112, %p113
      %p115 = scmp.ne.s32.totalorder %s104, %s107
      %p116 = scmp.eq.s32.totalorder %s29, 1
      %p117 = por %p115, %p116
      %p118 = scmp.ne.s32.totalorder %s107, %s108
      %p119 = scmp.eq.s32.totalorder %s29, 0
      %p120 = por %p118, %p119
      %p121 = scmp.ne.s32.totalorder %s107, %s108
      %p122 = scmp.eq.s32.totalorder %s30, 1
      %p123 = por %p121, %p122
      %p125 = scmp.ne.s32.totalorder %s108, %s124
      %p126 = scmp.eq.s32.totalorder %s30, 0
      %p127 = por %p125, %p126
      %s129 = sadd.s32 %s128, 1
      %p132 = scmp.eq.s32.totalorder %s24, 1
      %p133 = scmp.ne.s32.totalorder %s128, %s130
      %p134 = scmp.eq.s32.totalorder %s24, 0
      %p135 = por %p133, %p134
      %p136 = scmp.ne.s32.totalorder %s128, %s130
      %p137 = scmp.eq.s32.totalorder %s29, 1
      %p138 = por %p136, %p137
      %p139 = scmp.ne.s32.totalorder %s130, %s131
      %p140 = scmp.eq.s32.totalorder %s29, 0
      %p141 = por %p139, %p140
      %p142 = scmp.ne.s32.totalorder %s130, %s131
      %p143 = scmp.eq.s32.totalorder %s30, 1
      %p144 = por %p142, %p143
      %p146 = scmp.ne.s32.totalorder %s131, %s145
      %p147 = scmp.eq.s32.totalorder %s30, 0
      %p148 = por %p146, %p147
      %s150 = sadd.s32 %s149, 1
      %p153 = scmp.eq.s32.totalorder %s24, 1
      %p154 = scmp.ne.s32.totalorder %s149, %s151
      %p155 = scmp.eq.s32.totalorder %s24, 0
      %p156 = por %p154, %p155
      %p157 = scmp.ne.s32.totalorder %s149, %s151
      %p158 = scmp.eq.s32.totalorder %s29, 1
      %p159 = por %p157, %p158
      %p160 = scmp.ne.s32.totalorder %s151, %s152
      %p161 = scmp.eq.s32.totalorder %s29, 0
      %p162 = por %p160, %p161
      %p163 = scmp.ne.s32.totalorder %s151, %s152
      %p164 = scmp.eq.s32.totalorder %s30, 1
      %p165 = por %p163, %p164
      %p167 = scmp.ne.s32.totalorder %s152, %s166
      %p168 = scmp.eq.s32.totalorder %s30, 0
      %p169 = por %p167, %p168
      %s171 = sadd.s32 %s170, 1
      %p174 = scmp.eq.s32.totalorder %s24, 1
      %p175 = scmp.ne.s32.totalorder %s170, %s172
      %p176 = scmp.eq.s32.totalorder %s24, 0
      %p177 = por %p175, %p176
      %p178 = scmp.ne.s32.totalorder %s170, %s172
      %p179 = scmp.eq.s32.totalorder %s29, 1
      %p180 = por %p178, %p179
      %p181 = scmp.ne.s32.totalorder %s172, %s173
      %p182 = scmp.eq.s32.totalorder %s29, 0
      %p183 = por %p181, %p182
      %p184 = scmp.ne.s32.totalorder %s172, %s173
      %p185 = scmp.eq.s32.totalorder %s30, 1
      %p186 = por %p184, %p185
      %p188 = scmp.ne.s32.totalorder %s173, %s187
      %p189 = scmp.eq.s32.totalorder %s30, 0
      %p190 = por %p188, %p189
      %s192 = sadd.s32 %s191, 1
      %p195 = scmp.eq.s32.totalorder %s24, 1
      %p196 = scmp.ne.s32.totalorder %s191, %s193
      %p197 = scmp.eq.s32.totalorder %s24, 0
      %p198 = por %p196, %p197
      %p199 = scmp.ne.s32.totalorder %s191, %s193
      %p200 = scmp.eq.s32.totalorder %s29, 1
      %p201 = por %p199, %p200
      %p202 = scmp.ne.s32.totalorder %s193, %s194
      %p203 = scmp.eq.s32.totalorder %s29, 0
      %p204 = por %p202, %p203
      %p205 = scmp.ne.s32.totalorder %s193, %s194
      %p206 = scmp.eq.s32.totalorder %s30, 1
      %p207 = por %p205, %p206
      %p209 = scmp.ne.s32.totalorder %s194, %s208
      %p210 = scmp.eq.s32.totalorder %s30, 0
      %p211 = por %p209, %p210
      %s212 = ssub.s32 %s32, %s39
      %s213 = ssub.s32 %s31, %s43
      %s214 = sor.u32 %s212, %s213
      %p215 = scmp.eq.s32.totalorder %s214, 0
      %s217 = sadd.s32 %s216, 1
      %s218 = scalar_select %p215, %s216, %s217
      %p221 = pneg %p215
      %p222 = scmp.eq.s32.totalorder %s24, 1
      %p223 = por %p221, %p222
      %p224 = scmp.ne.s32.totalorder %s216, %s219
      %p225 = scmp.eq.s32.totalorder %s24, 0
      %p226 = por %p224, %p225
      %p227 = scmp.ne.s32.totalorder %s216, %s219
      %p228 = scmp.eq.s32.totalorder %s29, 1
      %p229 = por %p227, %p228
      %p230 = scmp.ne.s32.totalorder %s219, %s220
      %p231 = scmp.eq.s32.totalorder %s29, 0
      %p232 = por %p230, %p231
      %p233 = scmp.ne.s32.totalorder %s219, %s220
      %p234 = scmp.eq.s32.totalorder %s30, 1
      %p235 = por %p233, %p234
      %p237 = scmp.ne.s32.totalorder %s220, %s236
      %p238 = scmp.eq.s32.totalorder %s30, 0
      %p239 = por %p237, %p238
      %p240 = scmp.le.s32.totalorder 1, %s24
      %p241 = scmp.lt.s32.totalorder %s24, 3
      %p242 = pnand %p240, %p241
      %p243 = pneg %p242
      // Predicated region
      $region9: #{tpu_custom_call.1} parent=5 // pred_check
        _
      $region10: #{tpu_custom_call.1} parent=5 // pred_check_branch
        %245 = sbr.rel (%p242) target = $region12
      $region11: #{tpu_custom_call.1} parent=5 // pred_region
        %s246 = ssub.s32 %s24, 1
        // Predicated region
        $region13: #{tpu_custom_call.1} parent=11 // pred_check
          %p247 = pneg %p141
        $region14: #{tpu_custom_call.1} parent=11 // pred_check_branch
          %249 = sbr.rel (%p247) target = $region16
        $region15: #{tpu_custom_call.1} parent=11 // pred_region
          %251 = vsyncadd [#allocation10], 0
          %s252 = sshll.u32 %s3, 4
          %s253 = int_to_ptr.hbm [resolvable:$true] %s252
          %s254 = sshll.u32 [#allocation9], 4
          %s255 = int_to_ptr.vmem [resolvable:$true] %s254
          %260 = dma.hbm_to_vmem [thread:$0]  %s253, 512, %s255, [#allocation10], 128, 128, 8
        $region16: #{tpu_custom_call.1} parent=11 // pred_fallthru
          _
        // Predicated region
        $region17: #{tpu_custom_call.1} parent=11 // pred_check
          %p261 = pneg %p162
        $region18: #{tpu_custom_call.1} parent=11 // pred_check_branch
          %263 = sbr.rel (%p261) target = $region20
        $region19: #{tpu_custom_call.1} parent=11 // pred_region
          %265 = vsyncadd [#allocation10], 0
          %s266 = sshll.u32 %s4, 4
          %s267 = int_to_ptr.hbm [resolvable:$true] %s266
          %s268 = sshll.u32 [#allocation11], 4
          %s269 = int_to_ptr.vmem [resolvable:$true] %s268
          %274 = dma.hbm_to_vmem [thread:$0]  %s267, 512, %s269, [#allocation10], 128, 128, 8
        $region20: #{tpu_custom_call.1} parent=11 // pred_fallthru
          _
        // Predicated region
        $region21: #{tpu_custom_call.1} parent=11 // pred_check
          %p275 = pneg %p183
        $region22: #{tpu_custom_call.1} parent=11 // pred_check_branch
          %277 = sbr.rel (%p275) target = $region24
        $region23: #{tpu_custom_call.1} parent=11 // pred_region
          %279 = vsyncadd [#allocation13], 0
          %s280 = sshll.u32 %s5, 4
          %s281 = int_to_ptr.hbm [resolvable:$true] %s280
          %s282 = sshll.u32 [#allocation12], 4
          %s283 = int_to_ptr.vmem [resolvable:$true] %s282
          %288 = dma.hbm_to_vmem [thread:$0]  %s281, 512, %s283, [#allocation13], 128, 128, 8
        $region24: #{tpu_custom_call.1} parent=11 // pred_fallthru
          _
        // Predicated region
        $region25: #{tpu_custom_call.1} parent=11 // pred_check
          %p289 = pneg %p204
        $region26: #{tpu_custom_call.1} parent=11 // pred_check_branch
          %291 = sbr.rel (%p289) target = $region28
        $region27: #{tpu_custom_call.1} parent=11 // pred_region
          _
        $region28: #{tpu_custom_call.1} parent=11 // pred_fallthru
          _
      $region12: #{tpu_custom_call.1} parent=5 // pred_fallthru
        _
      %p292 = scmp.lt.s32.totalorder %s24, 2
      // Predicated region
      $region29: #{tpu_custom_call.1} parent=5 // pred_check
        %p293 = pneg %p292
      $region30: #{tpu_custom_call.1} parent=5 // pred_check_branch
        %295 = sbr.rel (%p293) target = $region32
      $region31: #{tpu_custom_call.1} parent=5 // pred_region
        // Predicated region
        $region33: #{tpu_custom_call.1} parent=31 // pred_check
          %p296 = pneg %p58
        $region34: #{tpu_custom_call.1} parent=31 // pred_check_branch
          %298 = sbr.rel (%p296) target = $region36
        $region35: #{tpu_custom_call.1} parent=31 // pred_region
          %s299 = sand.u32 %s48, 1
          %s300 = scalar_lea.sflag [#allocation4], %s299
          %s301 = sand.u32 %s48, 1
          %s302 = smul.addr %s301, 16
          %s303 = scalar_lea.vmem [#allocation3], %s302
          %s304 = smul.u32 8, %s32
          %306 = vsyncadd %s300, 0
          %s307 = sadd.s32 %s31, %s304
          %s308 = smul.addr %s307, 2
          %s309 = scalar_lea.hbm %s0, %s308
          %s310 = sshll.u32 %s309, 4
          %s311 = int_to_ptr.hbm [resolvable:$true] %s310
          %s312 = sshll.u32 %s303, 4
          %s313 = int_to_ptr.vmem [resolvable:$true] %s312
          %318 = dma.hbm_to_vmem [thread:$0]  %s311, 256, %s313, %s300, 32, 32, 2
        $region36: #{tpu_custom_call.1} parent=31 // pred_fallthru
          _
        // Predicated region
        $region37: #{tpu_custom_call.1} parent=31 // pred_check
          %p319 = pneg %p86
        $region38: #{tpu_custom_call.1} parent=31 // pred_check_branch
          %321 = sbr.rel (%p319) target = $region40
        $region39: #{tpu_custom_call.1} parent=31 // pred_region
          %s322 = sand.u32 %s24, 1
          %s323 = scalar_lea.sflag [#allocation7], %s322
          %s324 = sand.u32 %s76, 1
          %s325 = smul.addr %s324, 16
          %s326 = scalar_lea.vmem [#allocation6], %s325
          %s327 = smul.u32 8, %s32
          %329 = vsyncadd %s323, 0
          %s330 = sadd.s32 %s31, %s327
          %s331 = smul.addr %s330, 2
          %s332 = scalar_lea.hbm %s1, %s331
          %s333 = sshll.u32 %s332, 4
          %s334 = int_to_ptr.hbm [resolvable:$true] %s333
          %s335 = sshll.u32 %s326, 4
          %s336 = int_to_ptr.vmem [resolvable:$true] %s335
          %341 = dma.hbm_to_vmem [thread:$0]  %s334, 256, %s336, %s323, 32, 32, 2
        $region40: #{tpu_custom_call.1} parent=31 // pred_fallthru
          _
        // Predicated region
        $region41: #{tpu_custom_call.1} parent=31 // pred_check
          %p342 = pneg %p114
        $region42: #{tpu_custom_call.1} parent=31 // pred_check_branch
          %344 = sbr.rel (%p342) target = $region44
        $region43: #{tpu_custom_call.1} parent=31 // pred_region
          %s345 = sand.u32 %s24, 1
          %s346 = scalar_lea.sflag [#allocation7], %s345
          %s347 = sand.u32 %s104, 1
          %s348 = smul.addr %s347, 16
          %s349 = scalar_lea.vmem [#allocation8], %s348
          %s350 = smul.u32 8, %s32
          %352 = vsyncadd %s346, 0
          %s353 = sadd.s32 %s31, %s350
          %s354 = smul.addr %s353, 2
          %s355 = scalar_lea.hbm %s2, %s354
          %s356 = sshll.u32 %s355, 4
          %s357 = int_to_ptr.hbm [resolvable:$true] %s356
          %s358 = sshll.u32 %s349, 4
          %s359 = int_to_ptr.vmem [resolvable:$true] %s358
          %364 = dma.hbm_to_vmem [thread:$0]  %s357, 256, %s359, %s346, 32, 32, 2
        $region44: #{tpu_custom_call.1} parent=31 // pred_fallthru
          _
      $region32: #{tpu_custom_call.1} parent=5 // pred_fallthru
        _
      %p365 = scmp.le.s32.totalorder 1, %s24
      %p366 = scmp.lt.s32.totalorder %s24, 3
      %p367 = pnand %p365, %p366
      %p368 = pneg %p367
      // Predicated region
      $region45: #{tpu_custom_call.1} parent=5 // pred_check
        _
      $region46: #{tpu_custom_call.1} parent=5 // pred_check_branch
        %370 = sbr.rel (%p367) target = $region48
      $region47: #{tpu_custom_call.1} parent=5 // pred_region
        %s371 = ssub.s32 %s24, 1
        %s372 = sand.u32 %s51, 1
        %s373 = scalar_lea.sflag [#allocation4], %s372
        %s374 = sand.u32 %s51, 1
        %s375 = smul.addr %s374, 16
        %s376 = scalar_lea.vmem [#allocation3], %s375
        // Predicated region
        $region49: #{tpu_custom_call.1} parent=47 // pred_check
          %p377 = pneg %p64
        $region50: #{tpu_custom_call.1} parent=47 // pred_check_branch
          %379 = sbr.rel (%p377) target = $region52
        $region51: #{tpu_custom_call.1} parent=47 // pred_region
          %381 = dma.done %s373, 256
        $region52: #{tpu_custom_call.1} parent=47 // pred_fallthru
          _
        %s382 = sand.u32 %s29, 1
        %s383 = scalar_lea.sflag [#allocation7], %s382
        %s384 = sand.u32 %s79, 1
        %s385 = smul.addr %s384, 16
        %s386 = scalar_lea.vmem [#allocation6], %s385
        // Predicated region
        $region53: #{tpu_custom_call.1} parent=47 // pred_check
          %p387 = pneg %p92
        $region54: #{tpu_custom_call.1} parent=47 // pred_check_branch
          %389 = sbr.rel (%p387) target = $region56
        $region55: #{tpu_custom_call.1} parent=47 // pred_region
          %391 = dma.done %s383, 256
        $region56: #{tpu_custom_call.1} parent=47 // pred_fallthru
          _
        %s392 = sand.u32 %s29, 1
        %s393 = scalar_lea.sflag [#allocation7], %s392
        %s394 = sand.u32 %s107, 1
        %s395 = smul.addr %s394, 16
        %s396 = scalar_lea.vmem [#allocation8], %s395
        // Predicated region
        $region57: #{tpu_custom_call.1} parent=47 // pred_check
          %p397 = pneg %p120
        $region58: #{tpu_custom_call.1} parent=47 // pred_check_branch
          %399 = sbr.rel (%p397) target = $region60
        $region59: #{tpu_custom_call.1} parent=47 // pred_region
          %401 = dma.done %s393, 256
        $region60: #{tpu_custom_call.1} parent=47 // pred_fallthru
          _
        // Predicated region
        $region61: #{tpu_custom_call.1} parent=47 // pred_check
          %p402 = pneg %p141
        $region62: #{tpu_custom_call.1} parent=47 // pred_check_branch
          %404 = sbr.rel (%p402) target = $region64
        $region63: #{tpu_custom_call.1} parent=47 // pred_region
          %406 = dma.done [#allocation10], 512
        $region64: #{tpu_custom_call.1} parent=47 // pred_fallthru
          _
        // Predicated region
        $region65: #{tpu_custom_call.1} parent=47 // pred_check
          %p407 = pneg %p162
        $region66: #{tpu_custom_call.1} parent=47 // pred_check_branch
          %409 = sbr.rel (%p407) target = $region68
        $region67: #{tpu_custom_call.1} parent=47 // pred_region
          %411 = dma.done [#allocation10], 512
        $region68: #{tpu_custom_call.1} parent=47 // pred_fallthru
          _
        // Predicated region
        $region69: #{tpu_custom_call.1} parent=47 // pred_check
          %p412 = pneg %p183
        $region70: #{tpu_custom_call.1} parent=47 // pred_check_branch
          %414 = sbr.rel (%p412) target = $region72
        $region71: #{tpu_custom_call.1} parent=47 // pred_region
          %416 = dma.done [#allocation13], 512
        $region72: #{tpu_custom_call.1} parent=47 // pred_fallthru
          _
        %s417 = sand.u32 %s51, 1
        %s418 = scalar_lea.sflag [#allocation4], %s417
        %s419 = sand.u32 %s51, 1
        %s420 = smul.addr %s419, 16
        %s421 = scalar_lea.vmem [#allocation3], %s420
        %p422 = pneg %p64
        %p423 = pneg %p61
        %s424 = sand.u32 %s29, 1
        %s425 = scalar_lea.sflag [#allocation7], %s424
        %s426 = sand.u32 %s79, 1
        %s427 = smul.addr %s426, 16
        %s428 = scalar_lea.vmem [#allocation6], %s427
        %p429 = pneg %p92
        %p430 = pneg %p89
        %s431 = sand.u32 %s29, 1
        %s432 = scalar_lea.sflag [#allocation7], %s431
        %s433 = sand.u32 %s107, 1
        %s434 = smul.addr %s433, 16
        %s435 = scalar_lea.vmem [#allocation8], %s434
        %p436 = pneg %p120
        %p437 = pneg %p117
        %p438 = pneg %p141
        %p439 = pneg %p138
        %p440 = pneg %p162
        %p441 = pneg %p159
        %p442 = pneg %p183
        %p443 = pneg %p180
        %p444 = pneg %p204
        %p445 = pneg %p201
        %p446 = pneg %p232
        %p447 = pneg %p229
        %s448 = sand.u32 %s219, 1
        %s449 = scalar_lea.sflag [#allocation5], %s448
        %s450 = sand.u32 %s219, 1
        %s451 = smul.addr %s450, 16
        %s452 = scalar_lea.vmem [#allocation14], %s451
        %s453 = smul.u32 8, %s34
        %s454 = smul.u32 8, %s34
        %s455 = smul.u32 8, %s34
        %s456 = smul.u32 8, %s34
        %p457 = scmp.eq.s32.totalorder %s34, 0
        // Predicated region
        $region73: #{tpu_custom_call.1} parent=47 // pred_check
          %p458 = pneg %p457
        $region74: #{tpu_custom_call.1} parent=47 // pred_check_branch
          %460 = sbr.rel (%p458) target = $region76
        $region75: #{tpu_custom_call.1} parent=47 // pred_region
          %vm461 = vcmask 254976
          %462 = vst.msk [vmem:[#allocation2] sm:$0x3] %vm461, 0.0
        $region76: #{tpu_custom_call.1} parent=47 // pred_fallthru
          _
        %v463 = vld [vmem:[%s6] sm:$0x1]
        %v465 = vperm.slane %v463, 0
        %v467 = vld [vmem:[#allocation9] sm:$0xff]
        %v468 = vld [vmem:[#allocation9 + $0x8] sm:$0xff]
        %v469 = vld [vmem:[#allocation9 + $0x10] sm:$0xff]
        %v470 = vld [vmem:[#allocation9 + $0x18] sm:$0xff]
        %v471 = vld [vmem:[#allocation11] sm:$0xff]
        %v472 = vld [vmem:[#allocation11 + $0x8] sm:$0xff]
        %v473 = vld [vmem:[#allocation11 + $0x10] sm:$0xff]
        %v474 = vld [vmem:[#allocation11 + $0x18] sm:$0xff]
        %v475 = vld [vmem:[#allocation12] sm:$0xff]
        %v476 = vld [vmem:[#allocation12 + $0x8] sm:$0xff]
        %v477 = vld [vmem:[#allocation12 + $0x10] sm:$0xff]
        %v478 = vld [vmem:[#allocation12 + $0x18] sm:$0xff]
        %v479 = vld [vmem:[#allocation2] sm:$0x3]
        %vm480 = vcmask 261120
        %v482 = vsel %vm480, %v479, 0
        %484 = vmatpush.msra.mxu0 0.0
        %485 = vmatpush.msra.mxu0 0.0
        %486 = vmatpush.msra.mxu0 0.0
        %487 = vmatpush.msra.mxu0 0.0
        %488 = vmatpush.msra.mxu0 0.0
        %489 = vmatpush.msra.mxu0 0.0
        %490 = vmatpush.msra.mxu0 0.0
        %491 = vmatpush.msra.mxu0 0.0
        %492 = vmatpush.msra.mxu0 0.0
        %493 = vmatpush.msra.mxu0 0.0
        %494 = vmatpush.msra.mxu0 0.0
        %495 = vmatpush.msra.mxu0 0.0
        %496 = vmatpush.msra.mxu0 %v470
        %497 = vmatpush.msra.mxu0 %v469
        %498 = vmatpush.msra.mxu0 %v468
        %499 = vmatpush.msra.mxu0 %v467
        %500 = vmatmul.f32.gmra.mxu0 %v482
        %v501 = vpop.f32.mrf.mxu0
        %v502 = vadd.f32 0.0, %v501
        %503 = vdwg.mxu0
        %504 = vmatpush.msra.mxu0 0.0
        %505 = vmatpush.msra.mxu0 0.0
        %506 = vmatpush.msra.mxu0 0.0
        %507 = vmatpush.msra.mxu0 0.0
        %508 = vmatpush.msra.mxu0 0.0
        %509 = vmatpush.msra.mxu0 0.0
        %510 = vmatpush.msra.mxu0 0.0
        %511 = vmatpush.msra.mxu0 0.0
        %512 = vmatpush.msra.mxu0 0.0
        %513 = vmatpush.msra.mxu0 0.0
        %514 = vmatpush.msra.mxu0 0.0
        %515 = vmatpush.msra.mxu0 0.0
        %516 = vmatpush.msra.mxu0 %v474
        %517 = vmatpush.msra.mxu0 %v473
        %518 = vmatpush.msra.mxu0 %v472
        %519 = vmatpush.msra.mxu0 %v471
        %520 = vmatmul.f32.gmra.mxu0 %v482
        %v521 = vpop.f32.mrf.mxu0
        %v522 = vadd.f32 0.0, %v521
        %523 = vdwg.mxu0
        %v524 = vld [vmem:[%s376] sm:$0x3]
        %v525 = vadd.f32 %v524, %v502
        %v526 = vxor.u32 %v525, 2147483648
        %v527 = vmul.f32 %v526, 1.442695
        %v528 = vpow.pop %v527
        %v529 = vadd.f32 %v528, 1.0
        %v530 = vrcp.pop %v529
        %v531 = vmul.f32 %v529, %v530
        %v532 = vsub.f32 1.0, %v531
        %v533 = vmul.f32 %v530, %v532
        %v534 = vadd.f32 %v530, %v533
        %vm535 = vweird.f32 %v529
        %vm536 = vweird.f32 %v530
        %vm537 = vmor %vm535, %vm536
        %v538 = vsel %vm537, %v530, %v534
        %v539 = vand.u32 2147483647, %v529
        %vm540 = vcmp.eq.f32.partialorder %v539, 8.507059e+37
        %v541 = vand.u32 %v529, 2147483648
        %v542 = vor.u32 1.1754944e-38, %v541
        %v543 = vsel %vm540, %v542, %v538
        %v544 = vmul.f32 1.0, %v543
        %v545 = vld [vmem:[%s386] sm:$0x3]
        %v546 = vadd.f32 %v545, %v522
        %v547 = vxor.u32 %v546, 2147483648
        %v548 = vmul.f32 %v547, 1.442695
        %v549 = vpow.pop %v548
        %v550 = vadd.f32 %v549, 1.0
        %v551 = vrcp.pop %v550
        %v552 = vmul.f32 %v550, %v551
        %v553 = vsub.f32 1.0, %v552
        %v554 = vmul.f32 %v551, %v553
        %v555 = vadd.f32 %v551, %v554
        %vm556 = vweird.f32 %v550
        %vm557 = vweird.f32 %v551
        %vm558 = vmor %vm556, %vm557
        %v559 = vsel %vm558, %v551, %v555
        %v560 = vand.u32 2147483647, %v550
        %vm561 = vcmp.eq.f32.partialorder %v560, 8.507059e+37
        %v562 = vand.u32 %v550, 2147483648
        %v563 = vor.u32 1.1754944e-38, %v562
        %v564 = vsel %vm561, %v563, %v559
        %v565 = vmul.f32 1.0, %v564
        %v566 = vld [vmem:[%s396] sm:$0x3]
        %567 = vmatpush.msra.mxu0 0.0
        %568 = vmatpush.msra.mxu0 0.0
        %569 = vmatpush.msra.mxu0 0.0
        %570 = vmatpush.msra.mxu0 0.0
        %571 = vmatpush.msra.mxu0 0.0
        %572 = vmatpush.msra.mxu0 0.0
        %573 = vmatpush.msra.mxu0 0.0
        %574 = vmatpush.msra.mxu0 0.0
        %575 = vmatpush.msra.mxu0 0.0
        %576 = vmatpush.msra.mxu0 0.0
        %577 = vmatpush.msra.mxu0 0.0
        %578 = vmatpush.msra.mxu0 0.0
        %579 = vmatpush.msra.mxu0 %v478
        %580 = vmatpush.msra.mxu0 %v477
        %581 = vmatpush.msra.mxu0 %v476
        %582 = vmatpush.msra.mxu0 %v475
        %583 = vmatmul.f32.gmra.mxu0 %v482
        %v584 = vpop.f32.mrf.mxu0
        %v585 = vadd.f32 %v465, %v584
        %586 = vdwg.mxu0
        %v587 = vmul.f32 %v544, %v585
        %v588 = vadd.f32 %v566, %v587
        %v589 = vtanh.pop %v588
        %v590 = vsub.f32 1.0, %v565
        %v591 = vmul.f32 %v590, %v589
        %v592 = vmul.f32 %v565, %v479
        %v593 = vadd.f32 %v591, %v592
        %vm594 = vcmask 254976
        %595 = vst.msk [vmem:[%s452] sm:$0x3] %vm594, %v593
        %v597 = vsel %vm480, %v593, 0
        %599 = vmatpush.msra.mxu0 0.0
        %600 = vmatpush.msra.mxu0 0.0
        %601 = vmatpush.msra.mxu0 0.0
        %602 = vmatpush.msra.mxu0 0.0
        %603 = vmatpush.msra.mxu0 0.0
        %604 = vmatpush.msra.mxu0 0.0
        %605 = vmatpush.msra.mxu0 0.0
        %606 = vmatpush.msra.mxu0 0.0
        %607 = vmatpush.msra.mxu0 0.0
        %608 = vmatpush.msra.mxu0 0.0
        %609 = vmatpush.msra.mxu0 0.0
        %610 = vmatpush.msra.mxu0 0.0
        %611 = vmatpush.msra.mxu0 %v470
        %612 = vmatpush.msra.mxu0 %v469
        %613 = vmatpush.msra.mxu0 %v468
        %614 = vmatpush.msra.mxu0 %v467
        %615 = vmatmul.f32.gmra.mxu0 %v597
        %v616 = vpop.f32.mrf.mxu0
        %v617 = vadd.f32 0.0, %v616
        %618 = vdwg.mxu0
        %619 = vmatpush.msra.mxu0 0.0
        %620 = vmatpush.msra.mxu0 0.0
        %621 = vmatpush.msra.mxu0 0.0
        %622 = vmatpush.msra.mxu0 0.0
        %623 = vmatpush.msra.mxu0 0.0
        %624 = vmatpush.msra.mxu0 0.0
        %625 = vmatpush.msra.mxu0 0.0
        %626 = vmatpush.msra.mxu0 0.0
        %627 = vmatpush.msra.mxu0 0.0
        %628 = vmatpush.msra.mxu0 0.0
        %629 = vmatpush.msra.mxu0 0.0
        %630 = vmatpush.msra.mxu0 0.0
        %631 = vmatpush.msra.mxu0 %v474
        %632 = vmatpush.msra.mxu0 %v473
        %633 = vmatpush.msra.mxu0 %v472
        %634 = vmatpush.msra.mxu0 %v471
        %635 = vmatmul.f32.gmra.mxu0 %v597
        %v636 = vpop.f32.mrf.mxu0
        %v637 = vadd.f32 0.0, %v636
        %638 = vdwg.mxu0
        %s639 = scalar_lea.vmem %s376, 2 [#allocation3]
        %v640 = vld [vmem:[%s639] sm:$0x3]
        %v641 = vadd.f32 %v640, %v617
        %v642 = vxor.u32 %v641, 2147483648
        %v643 = vmul.f32 %v642, 1.442695
        %v644 = vpow.pop %v643
        %v645 = vadd.f32 %v644, 1.0
        %v646 = vrcp.pop %v645
        %v647 = vmul.f32 %v645, %v646
        %v648 = vsub.f32 1.0, %v647
        %v649 = vmul.f32 %v646, %v648
        %v650 = vadd.f32 %v646, %v649
        %vm651 = vweird.f32 %v645
        %vm652 = vweird.f32 %v646
        %vm653 = vmor %vm651, %vm652
        %v654 = vsel %vm653, %v646, %v650
        %v655 = vand.u32 2147483647, %v645
        %vm656 = vcmp.eq.f32.partialorder %v655, 8.507059e+37
        %v657 = vand.u32 %v645, 2147483648
        %v658 = vor.u32 1.1754944e-38, %v657
        %v659 = vsel %vm656, %v658, %v654
        %v660 = vmul.f32 1.0, %v659
        %s661 = scalar_lea.vmem %s386, 2 [#allocation6]
        %v662 = vld [vmem:[%s661] sm:$0x3]
        %v663 = vadd.f32 %v662, %v637
        %v664 = vxor.u32 %v663, 2147483648
        %v665 = vmul.f32 %v664, 1.442695
        %v666 = vpow.pop %v665
        %v667 = vadd.f32 %v666, 1.0
        %v668 = vrcp.pop %v667
        %v669 = vmul.f32 %v667, %v668
        %v670 = vsub.f32 1.0, %v669
        %v671 = vmul.f32 %v668, %v670
        %v672 = vadd.f32 %v668, %v671
        %vm673 = vweird.f32 %v667
        %vm674 = vweird.f32 %v668
        %vm675 = vmor %vm673, %vm674
        %v676 = vsel %vm675, %v668, %v672
        %v677 = vand.u32 2147483647, %v667
        %vm678 = vcmp.eq.f32.partialorder %v677, 8.507059e+37
        %v679 = vand.u32 %v667, 2147483648
        %v680 = vor.u32 1.1754944e-38, %v679
        %v681 = vsel %vm678, %v680, %v676
        %v682 = vmul.f32 1.0, %v681
        %s683 = scalar_lea.vmem %s396, 2 [#allocation8]
        %v684 = vld [vmem:[%s683] sm:$0x3]
        %685 = vmatpush.msra.mxu0 0.0
        %686 = vmatpush.msra.mxu0 0.0
        %687 = vmatpush.msra.mxu0 0.0
        %688 = vmatpush.msra.mxu0 0.0
        %689 = vmatpush.msra.mxu0 0.0
        %690 = vmatpush.msra.mxu0 0.0
        %691 = vmatpush.msra.mxu0 0.0
        %692 = vmatpush.msra.mxu0 0.0
        %693 = vmatpush.msra.mxu0 0.0
        %694 = vmatpush.msra.mxu0 0.0
        %695 = vmatpush.msra.mxu0 0.0
        %696 = vmatpush.msra.mxu0 0.0
        %697 = vmatpush.msra.mxu0 %v478
        %698 = vmatpush.msra.mxu0 %v477
        %699 = vmatpush.msra.mxu0 %v476
        %700 = vmatpush.msra.mxu0 %v475
        %701 = vmatmul.f32.gmra.mxu0 %v597
        %v702 = vpop.f32.mrf.mxu0
        %v703 = vadd.f32 %v465, %v702
        %704 = vdwg.mxu0
        %v705 = vmul.f32 %v660, %v703
        %v706 = vadd.f32 %v684, %v705
        %v707 = vtanh.pop %v706
        %v708 = vsub.f32 1.0, %v682
        %v709 = vmul.f32 %v708, %v707
        %v710 = vmul.f32 %v682, %v593
        %v711 = vadd.f32 %v709, %v710
        %s712 = scalar_lea.vmem %s452, 2 [#allocation14]
        %713 = vst.msk [vmem:[%s712] sm:$0x3] %vm594, %v711
        %v715 = vsel %vm480, %v711, 0
        %717 = vmatpush.msra.mxu0 0.0
        %718 = vmatpush.msra.mxu0 0.0
        %719 = vmatpush.msra.mxu0 0.0
        %720 = vmatpush.msra.mxu0 0.0
        %721 = vmatpush.msra.mxu0 0.0
        %722 = vmatpush.msra.mxu0 0.0
        %723 = vmatpush.msra.mxu0 0.0
        %724 = vmatpush.msra.mxu0 0.0
        %725 = vmatpush.msra.mxu0 0.0
        %726 = vmatpush.msra.mxu0 0.0
        %727 = vmatpush.msra.mxu0 0.0
        %728 = vmatpush.msra.mxu0 0.0
        %729 = vmatpush.msra.mxu0 %v470
        %730 = vmatpush.msra.mxu0 %v469
        %731 = vmatpush.msra.mxu0 %v468
        %732 = vmatpush.msra.mxu0 %v467
        %733 = vmatmul.f32.gmra.mxu0 %v715
        %v734 = vpop.f32.mrf.mxu0
        %v735 = vadd.f32 0.0, %v734
        %736 = vdwg.mxu0
        %737 = vmatpush.msra.mxu0 0.0
        %738 = vmatpush.msra.mxu0 0.0
        %739 = vmatpush.msra.mxu0 0.0
        %740 = vmatpush.msra.mxu0 0.0
        %741 = vmatpush.msra.mxu0 0.0
        %742 = vmatpush.msra.mxu0 0.0
        %743 = vmatpush.msra.mxu0 0.0
        %744 = vmatpush.msra.mxu0 0.0
        %745 = vmatpush.msra.mxu0 0.0
        %746 = vmatpush.msra.mxu0 0.0
        %747 = vmatpush.msra.mxu0 0.0
        %748 = vmatpush.msra.mxu0 0.0
        %749 = vmatpush.msra.mxu0 %v474
        %750 = vmatpush.msra.mxu0 %v473
        %751 = vmatpush.msra.mxu0 %v472
        %752 = vmatpush.msra.mxu0 %v471
        %753 = vmatmul.f32.gmra.mxu0 %v715
        %v754 = vpop.f32.mrf.mxu0
        %v755 = vadd.f32 0.0, %v754
        %756 = vdwg.mxu0
        %s757 = scalar_lea.vmem %s376, 4 [#allocation3]
        %v758 = vld [vmem:[%s757] sm:$0x3]
        %v759 = vadd.f32 %v758, %v735
        %v760 = vxor.u32 %v759, 2147483648
        %v761 = vmul.f32 %v760, 1.442695
        %v762 = vpow.pop %v761
        %v763 = vadd.f32 %v762, 1.0
        %v764 = vrcp.pop %v763
        %v765 = vmul.f32 %v763, %v764
        %v766 = vsub.f32 1.0, %v765
        %v767 = vmul.f32 %v764, %v766
        %v768 = vadd.f32 %v764, %v767
        %vm769 = vweird.f32 %v763
        %vm770 = vweird.f32 %v764
        %vm771 = vmor %vm769, %vm770
        %v772 = vsel %vm771, %v764, %v768
        %v773 = vand.u32 2147483647, %v763
        %vm774 = vcmp.eq.f32.partialorder %v773, 8.507059e+37
        %v775 = vand.u32 %v763, 2147483648
        %v776 = vor.u32 1.1754944e-38, %v775
        %v777 = vsel %vm774, %v776, %v772
        %v778 = vmul.f32 1.0, %v777
        %s779 = scalar_lea.vmem %s386, 4 [#allocation6]
        %v780 = vld [vmem:[%s779] sm:$0x3]
        %v781 = vadd.f32 %v780, %v755
        %v782 = vxor.u32 %v781, 2147483648
        %v783 = vmul.f32 %v782, 1.442695
        %v784 = vpow.pop %v783
        %v785 = vadd.f32 %v784, 1.0
        %v786 = vrcp.pop %v785
        %v787 = vmul.f32 %v785, %v786
        %v788 = vsub.f32 1.0, %v787
        %v789 = vmul.f32 %v786, %v788
        %v790 = vadd.f32 %v786, %v789
        %vm791 = vweird.f32 %v785
        %vm792 = vweird.f32 %v786
        %vm793 = vmor %vm791, %vm792
        %v794 = vsel %vm793, %v786, %v790
        %v795 = vand.u32 2147483647, %v785
        %vm796 = vcmp.eq.f32.partialorder %v795, 8.507059e+37
        %v797 = vand.u32 %v785, 2147483648
        %v798 = vor.u32 1.1754944e-38, %v797
        %v799 = vsel %vm796, %v798, %v794
        %v800 = vmul.f32 1.0, %v799
        %s801 = scalar_lea.vmem %s396, 4 [#allocation8]
        %v802 = vld [vmem:[%s801] sm:$0x3]
        %803 = vmatpush.msra.mxu0 0.0
        %804 = vmatpush.msra.mxu0 0.0
        %805 = vmatpush.msra.mxu0 0.0
        %806 = vmatpush.msra.mxu0 0.0
        %807 = vmatpush.msra.mxu0 0.0
        %808 = vmatpush.msra.mxu0 0.0
        %809 = vmatpush.msra.mxu0 0.0
        %810 = vmatpush.msra.mxu0 0.0
        %811 = vmatpush.msra.mxu0 0.0
        %812 = vmatpush.msra.mxu0 0.0
        %813 = vmatpush.msra.mxu0 0.0
        %814 = vmatpush.msra.mxu0 0.0
        %815 = vmatpush.msra.mxu0 %v478
        %816 = vmatpush.msra.mxu0 %v477
        %817 = vmatpush.msra.mxu0 %v476
        %818 = vmatpush.msra.mxu0 %v475
        %819 = vmatmul.f32.gmra.mxu0 %v715
        %v820 = vpop.f32.mrf.mxu0
        %v821 = vadd.f32 %v465, %v820
        %822 = vdwg.mxu0
        %v823 = vmul.f32 %v778, %v821
        %v824 = vadd.f32 %v802, %v823
        %v825 = vtanh.pop %v824
        %v826 = vsub.f32 1.0, %v800
        %v827 = vmul.f32 %v826, %v825
        %v828 = vmul.f32 %v800, %v711
        %v829 = vadd.f32 %v827, %v828
        %s830 = scalar_lea.vmem %s452, 4 [#allocation14]
        %831 = vst.msk [vmem:[%s830] sm:$0x3] %vm594, %v829
        %v833 = vsel %vm480, %v829, 0
        %835 = vmatpush.msra.mxu0 0.0
        %836 = vmatpush.msra.mxu0 0.0
        %837 = vmatpush.msra.mxu0 0.0
        %838 = vmatpush.msra.mxu0 0.0
        %839 = vmatpush.msra.mxu0 0.0
        %840 = vmatpush.msra.mxu0 0.0
        %841 = vmatpush.msra.mxu0 0.0
        %842 = vmatpush.msra.mxu0 0.0
        %843 = vmatpush.msra.mxu0 0.0
        %844 = vmatpush.msra.mxu0 0.0
        %845 = vmatpush.msra.mxu0 0.0
        %846 = vmatpush.msra.mxu0 0.0
        %847 = vmatpush.msra.mxu0 %v470
        %848 = vmatpush.msra.mxu0 %v469
        %849 = vmatpush.msra.mxu0 %v468
        %850 = vmatpush.msra.mxu0 %v467
        %851 = vmatmul.f32.gmra.mxu0 %v833
        %v852 = vpop.f32.mrf.mxu0
        %v853 = vadd.f32 0.0, %v852
        %854 = vdwg.mxu0
        %855 = vmatpush.msra.mxu0 0.0
        %856 = vmatpush.msra.mxu0 0.0
        %857 = vmatpush.msra.mxu0 0.0
        %858 = vmatpush.msra.mxu0 0.0
        %859 = vmatpush.msra.mxu0 0.0
        %860 = vmatpush.msra.mxu0 0.0
        %861 = vmatpush.msra.mxu0 0.0
        %862 = vmatpush.msra.mxu0 0.0
        %863 = vmatpush.msra.mxu0 0.0
        %864 = vmatpush.msra.mxu0 0.0
        %865 = vmatpush.msra.mxu0 0.0
        %866 = vmatpush.msra.mxu0 0.0
        %867 = vmatpush.msra.mxu0 %v474
        %868 = vmatpush.msra.mxu0 %v473
        %869 = vmatpush.msra.mxu0 %v472
        %870 = vmatpush.msra.mxu0 %v471
        %871 = vmatmul.f32.gmra.mxu0 %v833
        %v872 = vpop.f32.mrf.mxu0
        %v873 = vadd.f32 0.0, %v872
        %874 = vdwg.mxu0
        %s875 = scalar_lea.vmem %s376, 6 [#allocation3]
        %v876 = vld [vmem:[%s875] sm:$0x3]
        %v877 = vadd.f32 %v876, %v853
        %v878 = vxor.u32 %v877, 2147483648
        %v879 = vmul.f32 %v878, 1.442695
        %v880 = vpow.pop %v879
        %v881 = vadd.f32 %v880, 1.0
        %v882 = vrcp.pop %v881
        %v883 = vmul.f32 %v881, %v882
        %v884 = vsub.f32 1.0, %v883
        %v885 = vmul.f32 %v882, %v884
        %v886 = vadd.f32 %v882, %v885
        %vm887 = vweird.f32 %v881
        %vm888 = vweird.f32 %v882
        %vm889 = vmor %vm887, %vm888
        %v890 = vsel %vm889, %v882, %v886
        %v891 = vand.u32 2147483647, %v881
        %vm892 = vcmp.eq.f32.partialorder %v891, 8.507059e+37
        %v893 = vand.u32 %v881, 2147483648
        %v894 = vor.u32 1.1754944e-38, %v893
        %v895 = vsel %vm892, %v894, %v890
        %v896 = vmul.f32 1.0, %v895
        %s897 = scalar_lea.vmem %s386, 6 [#allocation6]
        %v898 = vld [vmem:[%s897] sm:$0x3]
        %v899 = vadd.f32 %v898, %v873
        %v900 = vxor.u32 %v899, 2147483648
        %v901 = vmul.f32 %v900, 1.442695
        %v902 = vpow.pop %v901
        %v903 = vadd.f32 %v902, 1.0
        %v904 = vrcp.pop %v903
        %v905 = vmul.f32 %v903, %v904
        %v906 = vsub.f32 1.0, %v905
        %v907 = vmul.f32 %v904, %v906
        %v908 = vadd.f32 %v904, %v907
        %vm909 = vweird.f32 %v903
        %vm910 = vweird.f32 %v904
        %vm911 = vmor %vm909, %vm910
        %v912 = vsel %vm911, %v904, %v908
        %v913 = vand.u32 2147483647, %v903
        %vm914 = vcmp.eq.f32.partialorder %v913, 8.507059e+37
        %v915 = vand.u32 %v903, 2147483648
        %v916 = vor.u32 1.1754944e-38, %v915
        %v917 = vsel %vm914, %v916, %v912
        %v918 = vmul.f32 1.0, %v917
        %s919 = scalar_lea.vmem %s396, 6 [#allocation8]
        %v920 = vld [vmem:[%s919] sm:$0x3]
        %921 = vmatpush.msra.mxu0 0.0
        %922 = vmatpush.msra.mxu0 0.0
        %923 = vmatpush.msra.mxu0 0.0
        %924 = vmatpush.msra.mxu0 0.0
        %925 = vmatpush.msra.mxu0 0.0
        %926 = vmatpush.msra.mxu0 0.0
        %927 = vmatpush.msra.mxu0 0.0
        %928 = vmatpush.msra.mxu0 0.0
        %929 = vmatpush.msra.mxu0 0.0
        %930 = vmatpush.msra.mxu0 0.0
        %931 = vmatpush.msra.mxu0 0.0
        %932 = vmatpush.msra.mxu0 0.0
        %933 = vmatpush.msra.mxu0 %v478
        %934 = vmatpush.msra.mxu0 %v477
        %935 = vmatpush.msra.mxu0 %v476
        %936 = vmatpush.msra.mxu0 %v475
        %937 = vmatmul.f32.gmra.mxu0 %v833
        %v938 = vpop.f32.mrf.mxu0
        %v939 = vadd.f32 %v465, %v938
        %940 = vdwg.mxu0
        %v941 = vmul.f32 %v896, %v939
        %v942 = vadd.f32 %v920, %v941
        %v943 = vtanh.pop %v942
        %v944 = vsub.f32 1.0, %v918
        %v945 = vmul.f32 %v944, %v943
        %v946 = vmul.f32 %v918, %v829
        %v947 = vadd.f32 %v945, %v946
        %s948 = scalar_lea.vmem %s452, 6 [#allocation14]
        %949 = vst.msk [vmem:[%s948] sm:$0x3] %vm594, %v947
        %v951 = vsel %vm480, %v947, 0
        %953 = vmatpush.msra.mxu0 0.0
        %954 = vmatpush.msra.mxu0 0.0
        %955 = vmatpush.msra.mxu0 0.0
        %956 = vmatpush.msra.mxu0 0.0
        %957 = vmatpush.msra.mxu0 0.0
        %958 = vmatpush.msra.mxu0 0.0
        %959 = vmatpush.msra.mxu0 0.0
        %960 = vmatpush.msra.mxu0 0.0
        %961 = vmatpush.msra.mxu0 0.0
        %962 = vmatpush.msra.mxu0 0.0
        %963 = vmatpush.msra.mxu0 0.0
        %964 = vmatpush.msra.mxu0 0.0
        %965 = vmatpush.msra.mxu0 %v470
        %966 = vmatpush.msra.mxu0 %v469
        %967 = vmatpush.msra.mxu0 %v468
        %968 = vmatpush.msra.mxu0 %v467
        %969 = vmatmul.f32.gmra.mxu0 %v951
        %v970 = vpop.f32.mrf.mxu0
        %v971 = vadd.f32 0.0, %v970
        %972 = vdwg.mxu0
        %973 = vmatpush.msra.mxu0 0.0
        %974 = vmatpush.msra.mxu0 0.0
        %975 = vmatpush.msra.mxu0 0.0
        %976 = vmatpush.msra.mxu0 0.0
        %977 = vmatpush.msra.mxu0 0.0
        %978 = vmatpush.msra.mxu0 0.0
        %979 = vmatpush.msra.mxu0 0.0
        %980 = vmatpush.msra.mxu0 0.0
        %981 = vmatpush.msra.mxu0 0.0
        %982 = vmatpush.msra.mxu0 0.0
        %983 = vmatpush.msra.mxu0 0.0
        %984 = vmatpush.msra.mxu0 0.0
        %985 = vmatpush.msra.mxu0 %v474
        %986 = vmatpush.msra.mxu0 %v473
        %987 = vmatpush.msra.mxu0 %v472
        %988 = vmatpush.msra.mxu0 %v471
        %989 = vmatmul.f32.gmra.mxu0 %v951
        %v990 = vpop.f32.mrf.mxu0
        %v991 = vadd.f32 0.0, %v990
        %992 = vdwg.mxu0
        %s993 = scalar_lea.vmem %s376, 8 [#allocation3]
        %v994 = vld [vmem:[%s993] sm:$0x3]
        %v995 = vadd.f32 %v994, %v971
        %v996 = vxor.u32 %v995, 2147483648
        %v997 = vmul.f32 %v996, 1.442695
        %v998 = vpow.pop %v997
        %v999 = vadd.f32 %v998, 1.0
        %v1000 = vrcp.pop %v999
        %v1001 = vmul.f32 %v999, %v1000
        %v1002 = vsub.f32 1.0, %v1001
        %v1003 = vmul.f32 %v1000, %v1002
        %v1004 = vadd.f32 %v1000, %v1003
        %vm1005 = vweird.f32 %v999
        %vm1006 = vweird.f32 %v1000
        %vm1007 = vmor %vm1005, %vm1006
        %v1008 = vsel %vm1007, %v1000, %v1004
        %v1009 = vand.u32 2147483647, %v999
        %vm1010 = vcmp.eq.f32.partialorder %v1009, 8.507059e+37
        %v1011 = vand.u32 %v999, 2147483648
        %v1012 = vor.u32 1.1754944e-38, %v1011
        %v1013 = vsel %vm1010, %v1012, %v1008
        %v1014 = vmul.f32 1.0, %v1013
        %s1015 = scalar_lea.vmem %s386, 8 [#allocation6]
        %v1016 = vld [vmem:[%s1015] sm:$0x3]
        %v1017 = vadd.f32 %v1016, %v991
        %v1018 = vxor.u32 %v1017, 2147483648
        %v1019 = vmul.f32 %v1018, 1.442695
        %v1020 = vpow.pop %v1019
        %v1021 = vadd.f32 %v1020, 1.0
        %v1022 = vrcp.pop %v1021
        %v1023 = vmul.f32 %v1021, %v1022
        %v1024 = vsub.f32 1.0, %v1023
        %v1025 = vmul.f32 %v1022, %v1024
        %v1026 = vadd.f32 %v1022, %v1025
        %vm1027 = vweird.f32 %v1021
        %vm1028 = vweird.f32 %v1022
        %vm1029 = vmor %vm1027, %vm1028
        %v1030 = vsel %vm1029, %v1022, %v1026
        %v1031 = vand.u32 2147483647, %v1021
        %vm1032 = vcmp.eq.f32.partialorder %v1031, 8.507059e+37
        %v1033 = vand.u32 %v1021, 2147483648
        %v1034 = vor.u32 1.1754944e-38, %v1033
        %v1035 = vsel %vm1032, %v1034, %v1030
        %v1036 = vmul.f32 1.0, %v1035
        %s1037 = scalar_lea.vmem %s396, 8 [#allocation8]
        %v1038 = vld [vmem:[%s1037] sm:$0x3]
        %1039 = vmatpush.msra.mxu0 0.0
        %1040 = vmatpush.msra.mxu0 0.0
        %1041 = vmatpush.msra.mxu0 0.0
        %1042 = vmatpush.msra.mxu0 0.0
        %1043 = vmatpush.msra.mxu0 0.0
        %1044 = vmatpush.msra.mxu0 0.0
        %1045 = vmatpush.msra.mxu0 0.0
        %1046 = vmatpush.msra.mxu0 0.0
        %1047 = vmatpush.msra.mxu0 0.0
        %1048 = vmatpush.msra.mxu0 0.0
        %1049 = vmatpush.msra.mxu0 0.0
        %1050 = vmatpush.msra.mxu0 0.0
        %1051 = vmatpush.msra.mxu0 %v478
        %1052 = vmatpush.msra.mxu0 %v477
        %1053 = vmatpush.msra.mxu0 %v476
        %1054 = vmatpush.msra.mxu0 %v475
        %1055 = vmatmul.f32.gmra.mxu0 %v951
        %v1056 = vpop.f32.mrf.mxu0
        %v1057 = vadd.f32 %v465, %v1056
        %1058 = vdwg.mxu0
        %v1059 = vmul.f32 %v1014, %v1057
        %v1060 = vadd.f32 %v1038, %v1059
        %v1061 = vtanh.pop %v1060
        %v1062 = vsub.f32 1.0, %v1036
        %v1063 = vmul.f32 %v1062, %v1061
        %v1064 = vmul.f32 %v1036, %v947
        %v1065 = vadd.f32 %v1063, %v1064
        %s1066 = scalar_lea.vmem %s452, 8 [#allocation14]
        %1067 = vst.msk [vmem:[%s1066] sm:$0x3] %vm594, %v1065
        %v1069 = vsel %vm480, %v1065, 0
        %1071 = vmatpush.msra.mxu0 0.0
        %1072 = vmatpush.msra.mxu0 0.0
        %1073 = vmatpush.msra.mxu0 0.0
        %1074 = vmatpush.msra.mxu0 0.0
        %1075 = vmatpush.msra.mxu0 0.0
        %1076 = vmatpush.msra.mxu0 0.0
        %1077 = vmatpush.msra.mxu0 0.0
        %1078 = vmatpush.msra.mxu0 0.0
        %1079 = vmatpush.msra.mxu0 0.0
        %1080 = vmatpush.msra.mxu0 0.0
        %1081 = vmatpush.msra.mxu0 0.0
        %1082 = vmatpush.msra.mxu0 0.0
        %1083 = vmatpush.msra.mxu0 %v470
        %1084 = vmatpush.msra.mxu0 %v469
        %1085 = vmatpush.msra.mxu0 %v468
        %1086 = vmatpush.msra.mxu0 %v467
        %1087 = vmatmul.f32.gmra.mxu0 %v1069
        %v1088 = vpop.f32.mrf.mxu0
        %v1089 = vadd.f32 0.0, %v1088
        %1090 = vdwg.mxu0
        %1091 = vmatpush.msra.mxu0 0.0
        %1092 = vmatpush.msra.mxu0 0.0
        %1093 = vmatpush.msra.mxu0 0.0
        %1094 = vmatpush.msra.mxu0 0.0
        %1095 = vmatpush.msra.mxu0 0.0
        %1096 = vmatpush.msra.mxu0 0.0
        %1097 = vmatpush.msra.mxu0 0.0
        %1098 = vmatpush.msra.mxu0 0.0
        %1099 = vmatpush.msra.mxu0 0.0
        %1100 = vmatpush.msra.mxu0 0.0
        %1101 = vmatpush.msra.mxu0 0.0
        %1102 = vmatpush.msra.mxu0 0.0
        %1103 = vmatpush.msra.mxu0 %v474
        %1104 = vmatpush.msra.mxu0 %v473
        %1105 = vmatpush.msra.mxu0 %v472
        %1106 = vmatpush.msra.mxu0 %v471
        %1107 = vmatmul.f32.gmra.mxu0 %v1069
        %v1108 = vpop.f32.mrf.mxu0
        %v1109 = vadd.f32 0.0, %v1108
        %1110 = vdwg.mxu0
        %s1111 = scalar_lea.vmem %s376, 10 [#allocation3]
        %v1112 = vld [vmem:[%s1111] sm:$0x3]
        %v1113 = vadd.f32 %v1112, %v1089
        %v1114 = vxor.u32 %v1113, 2147483648
        %v1115 = vmul.f32 %v1114, 1.442695
        %v1116 = vpow.pop %v1115
        %v1117 = vadd.f32 %v1116, 1.0
        %v1118 = vrcp.pop %v1117
        %v1119 = vmul.f32 %v1117, %v1118
        %v1120 = vsub.f32 1.0, %v1119
        %v1121 = vmul.f32 %v1118, %v1120
        %v1122 = vadd.f32 %v1118, %v1121
        %vm1123 = vweird.f32 %v1117
        %vm1124 = vweird.f32 %v1118
        %vm1125 = vmor %vm1123, %vm1124
        %v1126 = vsel %vm1125, %v1118, %v1122
        %v1127 = vand.u32 2147483647, %v1117
        %vm1128 = vcmp.eq.f32.partialorder %v1127, 8.507059e+37
        %v1129 = vand.u32 %v1117, 2147483648
        %v1130 = vor.u32 1.1754944e-38, %v1129
        %v1131 = vsel %vm1128, %v1130, %v1126
        %v1132 = vmul.f32 1.0, %v1131
        %s1133 = scalar_lea.vmem %s386, 10 [#allocation6]
        %v1134 = vld [vmem:[%s1133] sm:$0x3]
        %v1135 = vadd.f32 %v1134, %v1109
        %v1136 = vxor.u32 %v1135, 2147483648
        %v1137 = vmul.f32 %v1136, 1.442695
        %v1138 = vpow.pop %v1137
        %v1139 = vadd.f32 %v1138, 1.0
        %v1140 = vrcp.pop %v1139
        %v1141 = vmul.f32 %v1139, %v1140
        %v1142 = vsub.f32 1.0, %v1141
        %v1143 = vmul.f32 %v1140, %v1142
        %v1144 = vadd.f32 %v1140, %v1143
        %vm1145 = vweird.f32 %v1139
        %vm1146 = vweird.f32 %v1140
        %vm1147 = vmor %vm1145, %vm1146
        %v1148 = vsel %vm1147, %v1140, %v1144
        %v1149 = vand.u32 2147483647, %v1139
        %vm1150 = vcmp.eq.f32.partialorder %v1149, 8.507059e+37
        %v1151 = vand.u32 %v1139, 2147483648
        %v1152 = vor.u32 1.1754944e-38, %v1151
        %v1153 = vsel %vm1150, %v1152, %v1148
        %v1154 = vmul.f32 1.0, %v1153
        %s1155 = scalar_lea.vmem %s396, 10 [#allocation8]
        %v1156 = vld [vmem:[%s1155] sm:$0x3]
        %1157 = vmatpush.msra.mxu0 0.0
        %1158 = vmatpush.msra.mxu0 0.0
        %1159 = vmatpush.msra.mxu0 0.0
        %1160 = vmatpush.msra.mxu0 0.0
        %1161 = vmatpush.msra.mxu0 0.0
        %1162 = vmatpush.msra.mxu0 0.0
        %1163 = vmatpush.msra.mxu0 0.0
        %1164 = vmatpush.msra.mxu0 0.0
        %1165 = vmatpush.msra.mxu0 0.0
        %1166 = vmatpush.msra.mxu0 0.0
        %1167 = vmatpush.msra.mxu0 0.0
        %1168 = vmatpush.msra.mxu0 0.0
        %1169 = vmatpush.msra.mxu0 %v478
        %1170 = vmatpush.msra.mxu0 %v477
        %1171 = vmatpush.msra.mxu0 %v476
        %1172 = vmatpush.msra.mxu0 %v475
        %1173 = vmatmul.f32.gmra.mxu0 %v1069
        %v1174 = vpop.f32.mrf.mxu0
        %v1175 = vadd.f32 %v465, %v1174
        %1176 = vdwg.mxu0
        %v1177 = vmul.f32 %v1132, %v1175
        %v1178 = vadd.f32 %v1156, %v1177
        %v1179 = vtanh.pop %v1178
        %v1180 = vsub.f32 1.0, %v1154
        %v1181 = vmul.f32 %v1180, %v1179
        %v1182 = vmul.f32 %v1154, %v1065
        %v1183 = vadd.f32 %v1181, %v1182
        %s1184 = scalar_lea.vmem %s452, 10 [#allocation14]
        %1185 = vst.msk [vmem:[%s1184] sm:$0x3] %vm594, %v1183
        %v1187 = vsel %vm480, %v1183, 0
        %1189 = vmatpush.msra.mxu0 0.0
        %1190 = vmatpush.msra.mxu0 0.0
        %1191 = vmatpush.msra.mxu0 0.0
        %1192 = vmatpush.msra.mxu0 0.0
        %1193 = vmatpush.msra.mxu0 0.0
        %1194 = vmatpush.msra.mxu0 0.0
        %1195 = vmatpush.msra.mxu0 0.0
        %1196 = vmatpush.msra.mxu0 0.0
        %1197 = vmatpush.msra.mxu0 0.0
        %1198 = vmatpush.msra.mxu0 0.0
        %1199 = vmatpush.msra.mxu0 0.0
        %1200 = vmatpush.msra.mxu0 0.0
        %1201 = vmatpush.msra.mxu0 %v470
        %1202 = vmatpush.msra.mxu0 %v469
        %1203 = vmatpush.msra.mxu0 %v468
        %1204 = vmatpush.msra.mxu0 %v467
        %1205 = vmatmul.f32.gmra.mxu0 %v1187
        %v1206 = vpop.f32.mrf.mxu0
        %v1207 = vadd.f32 0.0, %v1206
        %1208 = vdwg.mxu0
        %1209 = vmatpush.msra.mxu0 0.0
        %1210 = vmatpush.msra.mxu0 0.0
        %1211 = vmatpush.msra.mxu0 0.0
        %1212 = vmatpush.msra.mxu0 0.0
        %1213 = vmatpush.msra.mxu0 0.0
        %1214 = vmatpush.msra.mxu0 0.0
        %1215 = vmatpush.msra.mxu0 0.0
        %1216 = vmatpush.msra.mxu0 0.0
        %1217 = vmatpush.msra.mxu0 0.0
        %1218 = vmatpush.msra.mxu0 0.0
        %1219 = vmatpush.msra.mxu0 0.0
        %1220 = vmatpush.msra.mxu0 0.0
        %1221 = vmatpush.msra.mxu0 %v474
        %1222 = vmatpush.msra.mxu0 %v473
        %1223 = vmatpush.msra.mxu0 %v472
        %1224 = vmatpush.msra.mxu0 %v471
        %1225 = vmatmul.f32.gmra.mxu0 %v1187
        %v1226 = vpop.f32.mrf.mxu0
        %v1227 = vadd.f32 0.0, %v1226
        %1228 = vdwg.mxu0
        %s1229 = scalar_lea.vmem %s376, 12 [#allocation3]
        %v1230 = vld [vmem:[%s1229] sm:$0x3]
        %v1231 = vadd.f32 %v1230, %v1207
        %v1232 = vxor.u32 %v1231, 2147483648
        %v1233 = vmul.f32 %v1232, 1.442695
        %v1234 = vpow.pop %v1233
        %v1235 = vadd.f32 %v1234, 1.0
        %v1236 = vrcp.pop %v1235
        %v1237 = vmul.f32 %v1235, %v1236
        %v1238 = vsub.f32 1.0, %v1237
        %v1239 = vmul.f32 %v1236, %v1238
        %v1240 = vadd.f32 %v1236, %v1239
        %vm1241 = vweird.f32 %v1235
        %vm1242 = vweird.f32 %v1236
        %vm1243 = vmor %vm1241, %vm1242
        %v1244 = vsel %vm1243, %v1236, %v1240
        %v1245 = vand.u32 2147483647, %v1235
        %vm1246 = vcmp.eq.f32.partialorder %v1245, 8.507059e+37
        %v1247 = vand.u32 %v1235, 2147483648
        %v1248 = vor.u32 1.1754944e-38, %v1247
        %v1249 = vsel %vm1246, %v1248, %v1244
        %v1250 = vmul.f32 1.0, %v1249
        %s1251 = scalar_lea.vmem %s386, 12 [#allocation6]
        %v1252 = vld [vmem:[%s1251] sm:$0x3]
        %v1253 = vadd.f32 %v1252, %v1227
        %v1254 = vxor.u32 %v1253, 2147483648
        %v1255 = vmul.f32 %v1254, 1.442695
        %v1256 = vpow.pop %v1255
        %v1257 = vadd.f32 %v1256, 1.0
        %v1258 = vrcp.pop %v1257
        %v1259 = vmul.f32 %v1257, %v1258
        %v1260 = vsub.f32 1.0, %v1259
        %v1261 = vmul.f32 %v1258, %v1260
        %v1262 = vadd.f32 %v1258, %v1261
        %vm1263 = vweird.f32 %v1257
        %vm1264 = vweird.f32 %v1258
        %vm1265 = vmor %vm1263, %vm1264
        %v1266 = vsel %vm1265, %v1258, %v1262
        %v1267 = vand.u32 2147483647, %v1257
        %vm1268 = vcmp.eq.f32.partialorder %v1267, 8.507059e+37
        %v1269 = vand.u32 %v1257, 2147483648
        %v1270 = vor.u32 1.1754944e-38, %v1269
        %v1271 = vsel %vm1268, %v1270, %v1266
        %v1272 = vmul.f32 1.0, %v1271
        %s1273 = scalar_lea.vmem %s396, 12 [#allocation8]
        %v1274 = vld [vmem:[%s1273] sm:$0x3]
        %1275 = vmatpush.msra.mxu0 0.0
        %1276 = vmatpush.msra.mxu0 0.0
        %1277 = vmatpush.msra.mxu0 0.0
        %1278 = vmatpush.msra.mxu0 0.0
        %1279 = vmatpush.msra.mxu0 0.0
        %1280 = vmatpush.msra.mxu0 0.0
        %1281 = vmatpush.msra.mxu0 0.0
        %1282 = vmatpush.msra.mxu0 0.0
        %1283 = vmatpush.msra.mxu0 0.0
        %1284 = vmatpush.msra.mxu0 0.0
        %1285 = vmatpush.msra.mxu0 0.0
        %1286 = vmatpush.msra.mxu0 0.0
        %1287 = vmatpush.msra.mxu0 %v478
        %1288 = vmatpush.msra.mxu0 %v477
        %1289 = vmatpush.msra.mxu0 %v476
        %1290 = vmatpush.msra.mxu0 %v475
        %1291 = vmatmul.f32.gmra.mxu0 %v1187
        %v1292 = vpop.f32.mrf.mxu0
        %v1293 = vadd.f32 %v465, %v1292
        %1294 = vdwg.mxu0
        %v1295 = vmul.f32 %v1250, %v1293
        %v1296 = vadd.f32 %v1274, %v1295
        %v1297 = vtanh.pop %v1296
        %v1298 = vsub.f32 1.0, %v1272
        %v1299 = vmul.f32 %v1298, %v1297
        %v1300 = vmul.f32 %v1272, %v1183
        %v1301 = vadd.f32 %v1299, %v1300
        %s1302 = scalar_lea.vmem %s452, 12 [#allocation14]
        %1303 = vst.msk [vmem:[%s1302] sm:$0x3] %vm594, %v1301
        %v1305 = vsel %vm480, %v1301, 0
        %1307 = vmatpush.msra.mxu0 0.0
        %1308 = vmatpush.msra.mxu0 0.0
        %1309 = vmatpush.msra.mxu0 0.0
        %1310 = vmatpush.msra.mxu0 0.0
        %1311 = vmatpush.msra.mxu0 0.0
        %1312 = vmatpush.msra.mxu0 0.0
        %1313 = vmatpush.msra.mxu0 0.0
        %1314 = vmatpush.msra.mxu0 0.0
        %1315 = vmatpush.msra.mxu0 0.0
        %1316 = vmatpush.msra.mxu0 0.0
        %1317 = vmatpush.msra.mxu0 0.0
        %1318 = vmatpush.msra.mxu0 0.0
        %1319 = vmatpush.msra.mxu0 %v470
        %1320 = vmatpush.msra.mxu0 %v469
        %1321 = vmatpush.msra.mxu0 %v468
        %1322 = vmatpush.msra.mxu0 %v467
        %1323 = vmatmul.f32.gmra.mxu0 %v1305
        %v1324 = vpop.f32.mrf.mxu0
        %v1325 = vadd.f32 0.0, %v1324
        %1326 = vdwg.mxu0
        %1327 = vmatpush.msra.mxu0 0.0
        %1328 = vmatpush.msra.mxu0 0.0
        %1329 = vmatpush.msra.mxu0 0.0
        %1330 = vmatpush.msra.mxu0 0.0
        %1331 = vmatpush.msra.mxu0 0.0
        %1332 = vmatpush.msra.mxu0 0.0
        %1333 = vmatpush.msra.mxu0 0.0
        %1334 = vmatpush.msra.mxu0 0.0
        %1335 = vmatpush.msra.mxu0 0.0
        %1336 = vmatpush.msra.mxu0 0.0
        %1337 = vmatpush.msra.mxu0 0.0
        %1338 = vmatpush.msra.mxu0 0.0
        %1339 = vmatpush.msra.mxu0 %v474
        %1340 = vmatpush.msra.mxu0 %v473
        %1341 = vmatpush.msra.mxu0 %v472
        %1342 = vmatpush.msra.mxu0 %v471
        %1343 = vmatmul.f32.gmra.mxu0 %v1305
        %v1344 = vpop.f32.mrf.mxu0
        %v1345 = vadd.f32 0.0, %v1344
        %1346 = vdwg.mxu0
        %s1347 = scalar_lea.vmem %s376, 14 [#allocation3]
        %v1348 = vld [vmem:[%s1347] sm:$0x3]
        %v1349 = vadd.f32 %v1348, %v1325
        %v1350 = vxor.u32 %v1349, 2147483648
        %v1351 = vmul.f32 %v1350, 1.442695
        %v1352 = vpow.pop %v1351
        %v1353 = vadd.f32 %v1352, 1.0
        %v1354 = vrcp.pop %v1353
        %v1355 = vmul.f32 %v1353, %v1354
        %v1356 = vsub.f32 1.0, %v1355
        %v1357 = vmul.f32 %v1354, %v1356
        %v1358 = vadd.f32 %v1354, %v1357
        %vm1359 = vweird.f32 %v1353
        %vm1360 = vweird.f32 %v1354
        %vm1361 = vmor %vm1359, %vm1360
        %v1362 = vsel %vm1361, %v1354, %v1358
        %v1363 = vand.u32 2147483647, %v1353
        %vm1364 = vcmp.eq.f32.partialorder %v1363, 8.507059e+37
        %v1365 = vand.u32 %v1353, 2147483648
        %v1366 = vor.u32 1.1754944e-38, %v1365
        %v1367 = vsel %vm1364, %v1366, %v1362
        %v1368 = vmul.f32 1.0, %v1367
        %s1369 = scalar_lea.vmem %s386, 14 [#allocation6]
        %v1370 = vld [vmem:[%s1369] sm:$0x3]
        %v1371 = vadd.f32 %v1370, %v1345
        %v1372 = vxor.u32 %v1371, 2147483648
        %v1373 = vmul.f32 %v1372, 1.442695
        %v1374 = vpow.pop %v1373
        %v1375 = vadd.f32 %v1374, 1.0
        %v1376 = vrcp.pop %v1375
        %v1377 = vmul.f32 %v1375, %v1376
        %v1378 = vsub.f32 1.0, %v1377
        %v1379 = vmul.f32 %v1376, %v1378
        %v1380 = vadd.f32 %v1376, %v1379
        %vm1381 = vweird.f32 %v1375
        %vm1382 = vweird.f32 %v1376
        %vm1383 = vmor %vm1381, %vm1382
        %v1384 = vsel %vm1383, %v1376, %v1380
        %v1385 = vand.u32 2147483647, %v1375
        %vm1386 = vcmp.eq.f32.partialorder %v1385, 8.507059e+37
        %v1387 = vand.u32 %v1375, 2147483648
        %v1388 = vor.u32 1.1754944e-38, %v1387
        %v1389 = vsel %vm1386, %v1388, %v1384
        %v1390 = vmul.f32 1.0, %v1389
        %s1391 = scalar_lea.vmem %s396, 14 [#allocation8]
        %v1392 = vld [vmem:[%s1391] sm:$0x3]
        %1393 = vmatpush.msra.mxu0 0.0
        %1394 = vmatpush.msra.mxu0 0.0
        %1395 = vmatpush.msra.mxu0 0.0
        %1396 = vmatpush.msra.mxu0 0.0
        %1397 = vmatpush.msra.mxu0 0.0
        %1398 = vmatpush.msra.mxu0 0.0
        %1399 = vmatpush.msra.mxu0 0.0
        %1400 = vmatpush.msra.mxu0 0.0
        %1401 = vmatpush.msra.mxu0 0.0
        %1402 = vmatpush.msra.mxu0 0.0
        %1403 = vmatpush.msra.mxu0 0.0
        %1404 = vmatpush.msra.mxu0 0.0
        %1405 = vmatpush.msra.mxu0 %v478
        %1406 = vmatpush.msra.mxu0 %v477
        %1407 = vmatpush.msra.mxu0 %v476
        %1408 = vmatpush.msra.mxu0 %v475
        %1409 = vmatmul.f32.gmra.mxu0 %v1305
        %v1410 = vpop.f32.mrf.mxu0
        %v1411 = vadd.f32 %v465, %v1410
        %1412 = vdwg.mxu0
        %v1413 = vmul.f32 %v1368, %v1411
        %v1414 = vadd.f32 %v1392, %v1413
        %v1415 = vtanh.pop %v1414
        %v1416 = vsub.f32 1.0, %v1390
        %v1417 = vmul.f32 %v1416, %v1415
        %v1418 = vmul.f32 %v1390, %v1301
        %v1419 = vadd.f32 %v1417, %v1418
        %s1420 = scalar_lea.vmem %s452, 14 [#allocation14]
        %1421 = vst.msk [vmem:[%s1420] sm:$0x3] %vm594, %v1419
        %1422 = vst.msk [vmem:[#allocation2] sm:$0x3] %vm594, %v1419
        %s1423 = sand.u32 %s219, 1
        %s1424 = scalar_lea.sflag [#allocation5], %s1423
        %s1425 = sand.u32 %s219, 1
        %s1426 = smul.addr %s1425, 16
        %s1427 = scalar_lea.vmem [#allocation14], %s1426
        // Predicated region
        $region77: #{tpu_custom_call.1} parent=47 // pred_check
          %p1428 = pneg %p229
        $region78: #{tpu_custom_call.1} parent=47 // pred_check_branch
          %1430 = sbr.rel (%p1428) target = $region80
        $region79: #{tpu_custom_call.1} parent=47 // pred_region
          %s1431 = smul.u32 8, %s34
          %1433 = vsyncadd %s1424, 0
          %s1434 = sadd.s32 %s33, %s1431
          %s1435 = smul.addr %s1434, 2
          %s1436 = scalar_lea.hbm %s7, %s1435
          %s1437 = sshll.u32 %s1427, 4
          %s1438 = int_to_ptr.vmem [resolvable:$true] %s1437
          %s1439 = sshll.u32 %s1436, 4
          %s1440 = int_to_ptr.hbm [resolvable:$true] %s1439
          %1445 = dma.vmem_to_hbm [thread:$0]  %s1438, 256, %s1440, %s1424, 32, 32, 2
        $region80: #{tpu_custom_call.1} parent=47 // pred_fallthru
          _
      $region48: #{tpu_custom_call.1} parent=5 // pred_fallthru
        _
      %p1446 = scmp.le.s32.totalorder 2, %s24
      // Predicated region
      $region81: #{tpu_custom_call.1} parent=5 // pred_check
        %p1447 = pneg %p1446
      $region82: #{tpu_custom_call.1} parent=5 // pred_check_branch
        %1449 = sbr.rel (%p1447) target = $region84
      $region83: #{tpu_custom_call.1} parent=5 // pred_region
        %s1450 = ssub.s32 %s24, 2
        // Predicated region
        $region85: #{tpu_custom_call.1} parent=83 // pred_check
          %p1451 = pneg %p235
        $region86: #{tpu_custom_call.1} parent=83 // pred_check_branch
          %1453 = sbr.rel (%p1451) target = $region88
        $region87: #{tpu_custom_call.1} parent=83 // pred_region
          %s1454 = sand.u32 %s220, 1
          %s1455 = scalar_lea.sflag [#allocation5], %s1454
          %s1456 = sand.u32 %s220, 1
          %s1457 = smul.addr %s1456, 16
          %s1458 = scalar_lea.vmem [#allocation14], %s1457
          %1460 = dma.done %s1455, 256
        $region88: #{tpu_custom_call.1} parent=83 // pred_fallthru
          _
      $region84: #{tpu_custom_call.1} parent=5 // pred_fallthru
        _
    $region6: #{tpu_custom_call.1} parent=1 // loop_footer
      %s28 = sadd.s32 1, %s24
    $region7: #{tpu_custom_call.1} parent=1 // loop_footer_branch
      %23 = sbr.rel target = $region3
    $region8: #{tpu_custom_call.1} parent=1 // loop_exit
      _
    %1461 = vsyncpa [#allocation4], 1
    %s1462 = scalar_lea.sflag [#allocation4], 1
    %1463 = vsyncpa %s1462, 1
    %1464 = vsyncpa [#allocation7], 1
    %s1465 = scalar_lea.sflag [#allocation7], 1
    %1466 = vsyncpa %s1465, 1
    %1467 = vsyncpa [#allocation10], 1
    %1468 = vsyncpa [#allocation13], 1
    %1469 = vsyncpa [#allocation5], 1
    %s1470 = scalar_lea.sflag [#allocation5], 1
    %1471 = vsyncpa %s1470, 1

</llo_original>
